<compile_context>
chip_gen: v5e
topology: v5e:2x2
jax: 0.10.0
libtpu: 0.0.40
codegen_flags: <defaults>
</compile_context>

<pallas_src>
import jax
import jax.numpy as jnp
from jax.experimental import pallas as pl
from jax.experimental.pallas import tpu as pltpu


def _cfc_kernel(x_ref,                 # (B, Tc, F)  input chunk
                wbx_ref, wbh_ref,      # (F, U), (H, U)  split backbone weight
                bbias_ref,             # (1, U)          backbone bias
                wh_ref, hbias_ref,     # (U, 4H), (1, 4H) fused head weight/bias
                out_ref,               # (B, Tc, H)
                h_scratch):            # (B, H) recurrent state (persists across grid)
    @pl.when(pl.program_id(0) == 0)
    def _():
        h_scratch[...] = jnp.zeros_like(h_scratch)

    tc = x_ref.shape[1]
    H = h_scratch.shape[1]

    # Hoist weight loads out of the time loop.
    wbx = wbx_ref[...]
    wbh = wbh_ref[...]
    b_bb = bbias_ref[...]
    wh = wh_ref[...]
    b_h = hbias_ref[...]

    def step(i, h):
        x_t = x_ref[:, i, :]                                   # (B, F)

        # Backbone: split matmul (no concat), LeCun activation.
        bb = (jnp.dot(x_t, wbx, preferred_element_type=jnp.float32)
              + jnp.dot(h, wbh, preferred_element_type=jnp.float32)
              + b_bb)
        bb = 1.7159 * jnp.tanh(0.666 * bb)                     # (B, U)

        # One fused head matmul: lane-full (B, U) @ (U, 4H).
        heads = jnp.dot(bb, wh, preferred_element_type=jnp.float32) + b_h

        ff1 = jnp.tanh(heads[:, 0 * H:1 * H])
        ff2 = jnp.tanh(heads[:, 1 * H:2 * H])
        t_a = heads[:, 2 * H:3 * H]
        t_b = heads[:, 3 * H:4 * H]

        # timespans=None => ts == 1.0 => t_a * ts + t_b == t_a + t_b
        t_interp = jax.nn.sigmoid(t_a + t_b)

        h_new = ff1 * (1.0 - t_interp) + t_interp * ff2        # mode='default'
        out_ref[:, i, :] = h_new.astype(out_ref.dtype)
        return h_new

    unroll = tc if tc <= 32 else 8
    h_final = jax.lax.fori_loop(0, tc, step, h_scratch[...], unroll=unroll)
    h_scratch[...] = h_final


def cfc_forward(x_btf, params, timespans=None, tc=None):
    """x_btf: (B, T, F) float32.  Returns (B, T, H)."""
    if timespans is not None:
        # TODO(synk): general timespans path (per-step ts) not implemented; the
        # ts==1.0 algebraic fusion below is only valid for timespans=None.
        raise NotImplementedError("kernel is specialized to timespans=None")

    B, T, F = x_btf.shape
    H = params["w1"].shape[1]

    # Host-side weight prep (done once, outside the kernel):
    wbx = params["wb"][:F]                                     # (F, U)
    wbh = params["wb"][F:]                                     # (H, U)
    b_bb = params["bb"]                                        # (1, U)
    wh = jnp.concatenate(
        [params["w1"], params["w2"], params["wa"], params["wt"]], axis=1)  # (U, 4H)
    b_h = jnp.concatenate(
        [params["b1"], params["b2"], params["ba"], params["bt"]], axis=1)  # (1, 4H)

    # Time chunking: one grid step handles tc time steps.
    if tc is None:
        tc = T if T <= 128 else 128                            # 128 keeps VMEM tiny even on v7x
    n_chunks = -(-T // tc)
    T_pad = n_chunks * tc
    if T_pad != T:
        x_btf = jnp.pad(x_btf, ((0, 0), (0, T_pad - T), (0, 0)))

    full = lambda arr: pl.BlockSpec(arr.shape, lambda c: (0,) * arr.ndim)
    weights = (wbx, wbh, b_bb, wh, b_h)

    out = pl.pallas_call(
        _cfc_kernel,
        out_shape=jax.ShapeDtypeStruct((B, T_pad, H), jnp.float32),
        grid_spec=pltpu.PrefetchScalarGridSpec(
            num_scalar_prefetch=0,
            grid=(n_chunks,),
            in_specs=[pl.BlockSpec((B, tc, F), lambda c: (0, c, 0))]
                     + [full(w) for w in weights],
            out_specs=pl.BlockSpec((B, tc, H), lambda c: (0, c, 0)),
            scratch_shapes=[pltpu.VMEM((B, H), jnp.float32)],
        ),
        compiler_params=pltpu.CompilerParams(
            # recurrence over time -> sequential grid axis
            dimension_semantics=("arbitrary",),
        ),
    )(x_btf, *weights)

    return out[:, :T, :]


def _xavier_uniform(key, fan_in, fan_out):
    limit = jnp.sqrt(6.0 / (fan_in + fan_out))
    # stored as (in, out) so the kernel can do x @ W directly
    return jax.random.uniform(key, (fan_in, fan_out), jnp.float32, -limit, limit)


def _linear_bias(key, fan_in, fan_out):
    # nn.Linear default bias init: U(-1/sqrt(fan_in), 1/sqrt(fan_in))
    bound = 1.0 / jnp.sqrt(jnp.float32(fan_in))
    return jax.random.uniform(key, (1, fan_out), jnp.float32, -bound, bound)


def make_params(key, in_features, hidden_size, backbone_units):
    cat = in_features + hidden_size
    keys = jax.random.split(key, 10)
    return {
        "wb": _xavier_uniform(keys[0], cat, backbone_units),
        "bb": _linear_bias(keys[1], cat, backbone_units),
        "w1": _xavier_uniform(keys[2], backbone_units, hidden_size),
        "b1": _linear_bias(keys[3], backbone_units, hidden_size),
        "w2": _xavier_uniform(keys[4], backbone_units, hidden_size),
        "b2": _linear_bias(keys[5], backbone_units, hidden_size),
        "wa": _xavier_uniform(keys[6], backbone_units, hidden_size),
        "ba": _linear_bias(keys[7], backbone_units, hidden_size),
        "wt": _xavier_uniform(keys[8], backbone_units, hidden_size),
        "bt": _linear_bias(keys[9], backbone_units, hidden_size),
    }


def cfc_reference(x_btf, params):
    """Pure-JAX reference mirroring the PyTorch module (timespans=None)."""
    B, T, F = x_btf.shape
    H = params["w1"].shape[1]
    h = jnp.zeros((B, H), jnp.float32)
    outs = []
    for t in range(T):
        cat = jnp.concatenate([x_btf[:, t], h], axis=1)
        bb = 1.7159 * jnp.tanh(0.666 * (cat @ params["wb"] + params["bb"]))
        ff1 = jnp.tanh(bb @ params["w1"] + params["b1"])
        ff2 = jnp.tanh(bb @ params["w2"] + params["b2"])
        t_a = bb @ params["wa"] + params["ba"]
        t_b = bb @ params["wt"] + params["bt"]
        ti = jax.nn.sigmoid(t_a * 1.0 + t_b)
        h = ff1 * (1.0 - ti) + ti * ff2
        outs.append(h)
    return jnp.stack(outs, axis=1)


if __name__ == "__main__":
    B, T, F = 2, 8, 4          # batch, seq_len, in_features
    H, U = 32, 128             # hidden_size, backbone_units

    key = jax.random.PRNGKey(0)
    k_x, k_p = jax.random.split(key)
    x = jax.random.normal(k_x, (B, T, F), jnp.float32)
    params = make_params(k_p, F, H, U)

    out = cfc_forward(x, params)
    out = jax.block_until_ready(out)

    ref = cfc_reference(x, params)
    assert out.shape == (B, T, H)
    assert jnp.allclose(out, ref, atol=3e-5, rtol=3e-5), "mismatch vs reference"

    print("KERNEL_OK")
</pallas_src>

<mosaic_0001>
module attributes {stable_mosaic.version = 11 : i64} {
  func.func @_cfc_kernel(%arg0: i32, %arg1: memref<2x8x4xf32, #tpu.memory_space<vmem>>, %arg2: memref<4x128xf32, #tpu.memory_space<vmem>>, %arg3: memref<32x128xf32, #tpu.memory_space<vmem>>, %arg4: memref<1x128xf32, #tpu.memory_space<vmem>>, %arg5: memref<128x128xf32, #tpu.memory_space<vmem>>, %arg6: memref<1x128xf32, #tpu.memory_space<vmem>>, %arg7: memref<2x8x32xf32, #tpu.memory_space<vmem>>, %arg8: memref<2x32xf32, #tpu.memory_space<vmem>>) attributes {dimension_semantics = [#tpu.dimension_semantics<arbitrary>], iteration_bounds = array<i64: 1>, scalar_prefetch = 0 : i64, scratch_operands = 1 : i64, tpu.core_type = #tpu.core_type<tc>, window_params = [{transform_indices = @transform_0, window_bounds = array<i64: 2, 8, 4>}, {pipeline_mode = #tpu.pipeline_mode<synchronous>, transform_indices = @transform_1, window_bounds = array<i64: 4, 128>}, {pipeline_mode = #tpu.pipeline_mode<synchronous>, transform_indices = @transform_2, window_bounds = array<i64: 32, 128>}, {pipeline_mode = #tpu.pipeline_mode<synchronous>, transform_indices = @transform_3, window_bounds = array<i64: 1, 128>}, {pipeline_mode = #tpu.pipeline_mode<synchronous>, transform_indices = @transform_4, window_bounds = array<i64: 128, 128>}, {pipeline_mode = #tpu.pipeline_mode<synchronous>, transform_indices = @transform_5, window_bounds = array<i64: 1, 128>}, {transform_indices = @transform_6, window_bounds = array<i64: 2, 8, 32>}]} {
    %c0_i32 = arith.constant 0 : i32
    %0 = arith.cmpi eq, %arg0, %c0_i32 : i32
    %1 = arith.extui %0 : i1 to i32
    %c0_i32_0 = arith.constant 0 : i32
    %2 = arith.cmpi ne, %1, %c0_i32_0 : i32
    scf.if %2 {
      %cst_102 = arith.constant 0.000000e+00 : f32
      %306 = vector.broadcast %cst_102 : f32 to vector<2x32xf32>
      %c0_103 = arith.constant 0 : index
      %c0_104 = arith.constant 0 : index
      %307 = vector.load %arg8[%c0_103, %c0_104] : memref<2x32xf32, #tpu.memory_space<vmem>>, vector<2x32xf32>
      tpu.vector_store %arg8[%c0_103, %c0_104], %306 {strides = array<i32>} : memref<2x32xf32, #tpu.memory_space<vmem>>, vector<2x32xf32>,
    } else {
    }
    %c0 = arith.constant 0 : index
    %c0_1 = arith.constant 0 : index
    %3 = vector.load %arg2[%c0, %c0_1] : memref<4x128xf32, #tpu.memory_space<vmem>>, vector<4x128xf32>
    %c0_2 = arith.constant 0 : index
    %c0_3 = arith.constant 0 : index
    %4 = vector.load %arg3[%c0_2, %c0_3] : memref<32x128xf32, #tpu.memory_space<vmem>>, vector<32x128xf32>
    %c0_4 = arith.constant 0 : index
    %c0_5 = arith.constant 0 : index
    %5 = vector.load %arg4[%c0_4, %c0_5] : memref<1x128xf32, #tpu.memory_space<vmem>>, vector<1x128xf32>
    %c0_6 = arith.constant 0 : index
    %c0_7 = arith.constant 0 : index
    %6 = vector.load %arg5[%c0_6, %c0_7] : memref<128x128xf32, #tpu.memory_space<vmem>>, vector<128x128xf32>
    %c0_8 = arith.constant 0 : index
    %c0_9 = arith.constant 0 : index
    %7 = vector.load %arg6[%c0_8, %c0_9] : memref<1x128xf32, #tpu.memory_space<vmem>>, vector<1x128xf32>
    %c0_10 = arith.constant 0 : index
    %c0_11 = arith.constant 0 : index
    %8 = vector.load %arg8[%c0_10, %c0_11] : memref<2x32xf32, #tpu.memory_space<vmem>>, vector<2x32xf32>
    %c0_i32_12 = arith.constant 0 : i32
    %c0_13 = arith.constant 0 : index
    %9 = arith.index_cast %c0_i32_12 : i32 to index
    %c0_14 = arith.constant 0 : index
    %10 = vector.load %arg1[%c0_13, %9, %c0_14] : memref<2x8x4xf32, #tpu.memory_space<vmem>>, vector<2x1x4xf32>
    %11 = vector.shape_cast %10 : vector<2x1x4xf32> to vector<2x4xf32>
    %cst = arith.constant dense<0.000000e+00> : vector<2x128xf32>
    %12 = tpu.matmul %11, %3, %cst {dimension_numbers = #tpu.dot_dimension_numbers<[1], [0], [0], [1], [0, 0, 1, 1], [], []>} : vector<2x4xf32>, vector<4x128xf32>, vector<2x128xf32> -> vector<2x128xf32>
    %cst_15 = arith.constant dense<0.000000e+00> : vector<2x128xf32>
    %13 = tpu.matmul %8, %4, %cst_15 {dimension_numbers = #tpu.dot_dimension_numbers<[1], [0], [0], [1], [0, 0, 1, 1], [], []>} : vector<2x32xf32>, vector<32x128xf32>, vector<2x128xf32> -> vector<2x128xf32>
    %14 = arith.addf %12, %13 : vector<2x128xf32>
    %15 = vector.broadcast %5 : vector<1x128xf32> to vector<2x128xf32>
    %16 = arith.addf %14, %15 : vector<2x128xf32>
    %cst_16 = arith.constant 6.660000e-01 : f32
    %17 = vector.broadcast %cst_16 : f32 to vector<2x128xf32>
    %18 = arith.mulf %17, %16 : vector<2x128xf32>
    %19 = math.tanh %18 : vector<2x128xf32>
    %cst_17 = arith.constant 1.715900e+00 : f32
    %20 = vector.broadcast %cst_17 : f32 to vector<2x128xf32>
    %21 = arith.mulf %20, %19 : vector<2x128xf32>
    %cst_18 = arith.constant dense<0.000000e+00> : vector<2x128xf32>
    %22 = tpu.matmul %21, %6, %cst_18 {dimension_numbers = #tpu.dot_dimension_numbers<[1], [0], [0], [1], [0, 0, 1, 1], [], []>} : vector<2x128xf32>, vector<128x128xf32>, vector<2x128xf32> -> vector<2x128xf32>
    %23 = vector.broadcast %7 : vector<1x128xf32> to vector<2x128xf32>
    %24 = arith.addf %22, %23 : vector<2x128xf32>
    %25 = vector.extract_strided_slice %24 {offsets = [0, 0], sizes = [2, 32], strides = [1, 1]} : vector<2x128xf32> to vector<2x32xf32>
    %26 = math.tanh %25 : vector<2x32xf32>
    %27 = vector.extract_strided_slice %24 {offsets = [0, 32], sizes = [2, 32], strides = [1, 1]} : vector<2x128xf32> to vector<2x32xf32>
    %28 = math.tanh %27 : vector<2x32xf32>
    %29 = vector.extract_strided_slice %24 {offsets = [0, 64], sizes = [2, 32], strides = [1, 1]} : vector<2x128xf32> to vector<2x32xf32>
    %30 = vector.extract_strided_slice %24 {offsets = [0, 96], sizes = [2, 32], strides = [1, 1]} : vector<2x128xf32> to vector<2x32xf32>
    %31 = arith.addf %29, %30 : vector<2x32xf32>
    %32 = arith.negf %31 : vector<2x32xf32>
    %33 = math.exp %32 : vector<2x32xf32>
    %cst_19 = arith.constant 1.000000e+00 : f32
    %34 = vector.broadcast %cst_19 : f32 to vector<2x32xf32>
    %35 = arith.addf %34, %33 : vector<2x32xf32>
    %36 = arith.divf %34, %35 : vector<2x32xf32>
    %cst_20 = arith.constant 1.000000e+00 : f32
    %37 = vector.broadcast %cst_20 : f32 to vector<2x32xf32>
    %38 = arith.subf %37, %36 : vector<2x32xf32>
    %39 = arith.mulf %26, %38 : vector<2x32xf32>
    %40 = arith.mulf %36, %28 : vector<2x32xf32>
    %41 = arith.addf %39, %40 : vector<2x32xf32>
    %c0_21 = arith.constant 0 : index
    %42 = arith.index_cast %c0_i32_12 : i32 to index
    %c0_22 = arith.constant 0 : index
    %43 = vector.load %arg7[%c0_21, %42, %c0_22] : memref<2x8x32xf32, #tpu.memory_space<vmem>>, vector<2x1x32xf32>
    %44 = vector.shape_cast %43 : vector<2x1x32xf32> to vector<2x32xf32>
    %45 = vector.shape_cast %41 : vector<2x32xf32> to vector<2x1x32xf32>
    tpu.vector_store %arg7[%c0_21, %42, %c0_22], %45 {strides = array<i32>} : memref<2x8x32xf32, #tpu.memory_space<vmem>>, vector<2x1x32xf32>,
    %c1_i32 = arith.constant 1 : i32
    %c0_23 = arith.constant 0 : index
    %46 = arith.index_cast %c1_i32 : i32 to index
    %c0_24 = arith.constant 0 : index
    %47 = vector.load %arg1[%c0_23, %46, %c0_24] : memref<2x8x4xf32, #tpu.memory_space<vmem>>, vector<2x1x4xf32>
    %48 = vector.shape_cast %47 : vector<2x1x4xf32> to vector<2x4xf32>
    %cst_25 = arith.constant dense<0.000000e+00> : vector<2x128xf32>
    %49 = tpu.matmul %48, %3, %cst_25 {dimension_numbers = #tpu.dot_dimension_numbers<[1], [0], [0], [1], [0, 0, 1, 1], [], []>} : vector<2x4xf32>, vector<4x128xf32>, vector<2x128xf32> -> vector<2x128xf32>
    %cst_26 = arith.constant dense<0.000000e+00> : vector<2x128xf32>
    %50 = tpu.matmul %41, %4, %cst_26 {dimension_numbers = #tpu.dot_dimension_numbers<[1], [0], [0], [1], [0, 0, 1, 1], [], []>} : vector<2x32xf32>, vector<32x128xf32>, vector<2x128xf32> -> vector<2x128xf32>
    %51 = arith.addf %49, %50 : vector<2x128xf32>
    %52 = vector.broadcast %5 : vector<1x128xf32> to vector<2x128xf32>
    %53 = arith.addf %51, %52 : vector<2x128xf32>
    %cst_27 = arith.constant 6.660000e-01 : f32
    %54 = vector.broadcast %cst_27 : f32 to vector<2x128xf32>
    %55 = arith.mulf %54, %53 : vector<2x128xf32>
    %56 = math.tanh %55 : vector<2x128xf32>
    %cst_28 = arith.constant 1.715900e+00 : f32
    %57 = vector.broadcast %cst_28 : f32 to vector<2x128xf32>
    %58 = arith.mulf %57, %56 : vector<2x128xf32>
    %cst_29 = arith.constant dense<0.000000e+00> : vector<2x128xf32>
    %59 = tpu.matmul %58, %6, %cst_29 {dimension_numbers = #tpu.dot_dimension_numbers<[1], [0], [0], [1], [0, 0, 1, 1], [], []>} : vector<2x128xf32>, vector<128x128xf32>, vector<2x128xf32> -> vector<2x128xf32>
    %60 = vector.broadcast %7 : vector<1x128xf32> to vector<2x128xf32>
    %61 = arith.addf %59, %60 : vector<2x128xf32>
    %62 = vector.extract_strided_slice %61 {offsets = [0, 0], sizes = [2, 32], strides = [1, 1]} : vector<2x128xf32> to vector<2x32xf32>
    %63 = math.tanh %62 : vector<2x32xf32>
    %64 = vector.extract_strided_slice %61 {offsets = [0, 32], sizes = [2, 32], strides = [1, 1]} : vector<2x128xf32> to vector<2x32xf32>
    %65 = math.tanh %64 : vector<2x32xf32>
    %66 = vector.extract_strided_slice %61 {offsets = [0, 64], sizes = [2, 32], strides = [1, 1]} : vector<2x128xf32> to vector<2x32xf32>
    %67 = vector.extract_strided_slice %61 {offsets = [0, 96], sizes = [2, 32], strides = [1, 1]} : vector<2x128xf32> to vector<2x32xf32>
    %68 = arith.addf %66, %67 : vector<2x32xf32>
    %69 = arith.negf %68 : vector<2x32xf32>
    %70 = math.exp %69 : vector<2x32xf32>
    %cst_30 = arith.constant 1.000000e+00 : f32
    %71 = vector.broadcast %cst_30 : f32 to vector<2x32xf32>
    %72 = arith.addf %71, %70 : vector<2x32xf32>
    %73 = arith.divf %71, %72 : vector<2x32xf32>
    %cst_31 = arith.constant 1.000000e+00 : f32
    %74 = vector.broadcast %cst_31 : f32 to vector<2x32xf32>
    %75 = arith.subf %74, %73 : vector<2x32xf32>
    %76 = arith.mulf %63, %75 : vector<2x32xf32>
    %77 = arith.mulf %73, %65 : vector<2x32xf32>
    %78 = arith.addf %76, %77 : vector<2x32xf32>
    %c0_32 = arith.constant 0 : index
    %79 = arith.index_cast %c1_i32 : i32 to index
    %c0_33 = arith.constant 0 : index
    %80 = vector.load %arg7[%c0_32, %79, %c0_33] : memref<2x8x32xf32, #tpu.memory_space<vmem>>, vector<2x1x32xf32>
    %81 = vector.shape_cast %80 : vector<2x1x32xf32> to vector<2x32xf32>
    %82 = vector.shape_cast %78 : vector<2x32xf32> to vector<2x1x32xf32>
    tpu.vector_store %arg7[%c0_32, %79, %c0_33], %82 {strides = array<i32>} : memref<2x8x32xf32, #tpu.memory_space<vmem>>, vector<2x1x32xf32>,
    %c2_i32 = arith.constant 2 : i32
    %c0_34 = arith.constant 0 : index
    %83 = arith.index_cast %c2_i32 : i32 to index
    %c0_35 = arith.constant 0 : index
    %84 = vector.load %arg1[%c0_34, %83, %c0_35] : memref<2x8x4xf32, #tpu.memory_space<vmem>>, vector<2x1x4xf32>
    %85 = vector.shape_cast %84 : vector<2x1x4xf32> to vector<2x4xf32>
    %cst_36 = arith.constant dense<0.000000e+00> : vector<2x128xf32>
    %86 = tpu.matmul %85, %3, %cst_36 {dimension_numbers = #tpu.dot_dimension_numbers<[1], [0], [0], [1], [0, 0, 1, 1], [], []>} : vector<2x4xf32>, vector<4x128xf32>, vector<2x128xf32> -> vector<2x128xf32>
    %cst_37 = arith.constant dense<0.000000e+00> : vector<2x128xf32>
    %87 = tpu.matmul %78, %4, %cst_37 {dimension_numbers = #tpu.dot_dimension_numbers<[1], [0], [0], [1], [0, 0, 1, 1], [], []>} : vector<2x32xf32>, vector<32x128xf32>, vector<2x128xf32> -> vector<2x128xf32>
    %88 = arith.addf %86, %87 : vector<2x128xf32>
    %89 = vector.broadcast %5 : vector<1x128xf32> to vector<2x128xf32>
    %90 = arith.addf %88, %89 : vector<2x128xf32>
    %cst_38 = arith.constant 6.660000e-01 : f32
    %91 = vector.broadcast %cst_38 : f32 to vector<2x128xf32>
    %92 = arith.mulf %91, %90 : vector<2x128xf32>
    %93 = math.tanh %92 : vector<2x128xf32>
    %cst_39 = arith.constant 1.715900e+00 : f32
    %94 = vector.broadcast %cst_39 : f32 to vector<2x128xf32>
    %95 = arith.mulf %94, %93 : vector<2x128xf32>
    %cst_40 = arith.constant dense<0.000000e+00> : vector<2x128xf32>
    %96 = tpu.matmul %95, %6, %cst_40 {dimension_numbers = #tpu.dot_dimension_numbers<[1], [0], [0], [1], [0, 0, 1, 1], [], []>} : vector<2x128xf32>, vector<128x128xf32>, vector<2x128xf32> -> vector<2x128xf32>
    %97 = vector.broadcast %7 : vector<1x128xf32> to vector<2x128xf32>
    %98 = arith.addf %96, %97 : vector<2x128xf32>
    %99 = vector.extract_strided_slice %98 {offsets = [0, 0], sizes = [2, 32], strides = [1, 1]} : vector<2x128xf32> to vector<2x32xf32>
    %100 = math.tanh %99 : vector<2x32xf32>
    %101 = vector.extract_strided_slice %98 {offsets = [0, 32], sizes = [2, 32], strides = [1, 1]} : vector<2x128xf32> to vector<2x32xf32>
    %102 = math.tanh %101 : vector<2x32xf32>
    %103 = vector.extract_strided_slice %98 {offsets = [0, 64], sizes = [2, 32], strides = [1, 1]} : vector<2x128xf32> to vector<2x32xf32>
    %104 = vector.extract_strided_slice %98 {offsets = [0, 96], sizes = [2, 32], strides = [1, 1]} : vector<2x128xf32> to vector<2x32xf32>
    %105 = arith.addf %103, %104 : vector<2x32xf32>
    %106 = arith.negf %105 : vector<2x32xf32>
    %107 = math.exp %106 : vector<2x32xf32>
    %cst_41 = arith.constant 1.000000e+00 : f32
    %108 = vector.broadcast %cst_41 : f32 to vector<2x32xf32>
    %109 = arith.addf %108, %107 : vector<2x32xf32>
    %110 = arith.divf %108, %109 : vector<2x32xf32>
    %cst_42 = arith.constant 1.000000e+00 : f32
    %111 = vector.broadcast %cst_42 : f32 to vector<2x32xf32>
    %112 = arith.subf %111, %110 : vector<2x32xf32>
    %113 = arith.mulf %100, %112 : vector<2x32xf32>
    %114 = arith.mulf %110, %102 : vector<2x32xf32>
    %115 = arith.addf %113, %114 : vector<2x32xf32>
    %c0_43 = arith.constant 0 : index
    %116 = arith.index_cast %c2_i32 : i32 to index
    %c0_44 = arith.constant 0 : index
    %117 = vector.load %arg7[%c0_43, %116, %c0_44] : memref<2x8x32xf32, #tpu.memory_space<vmem>>, vector<2x1x32xf32>
    %118 = vector.shape_cast %117 : vector<2x1x32xf32> to vector<2x32xf32>
    %119 = vector.shape_cast %115 : vector<2x32xf32> to vector<2x1x32xf32>
    tpu.vector_store %arg7[%c0_43, %116, %c0_44], %119 {strides = array<i32>} : memref<2x8x32xf32, #tpu.memory_space<vmem>>, vector<2x1x32xf32>,
    %c3_i32 = arith.constant 3 : i32
    %c0_45 = arith.constant 0 : index
    %120 = arith.index_cast %c3_i32 : i32 to index
    %c0_46 = arith.constant 0 : index
    %121 = vector.load %arg1[%c0_45, %120, %c0_46] : memref<2x8x4xf32, #tpu.memory_space<vmem>>, vector<2x1x4xf32>
    %122 = vector.shape_cast %121 : vector<2x1x4xf32> to vector<2x4xf32>
    %cst_47 = arith.constant dense<0.000000e+00> : vector<2x128xf32>
    %123 = tpu.matmul %122, %3, %cst_47 {dimension_numbers = #tpu.dot_dimension_numbers<[1], [0], [0], [1], [0, 0, 1, 1], [], []>} : vector<2x4xf32>, vector<4x128xf32>, vector<2x128xf32> -> vector<2x128xf32>
    %cst_48 = arith.constant dense<0.000000e+00> : vector<2x128xf32>
    %124 = tpu.matmul %115, %4, %cst_48 {dimension_numbers = #tpu.dot_dimension_numbers<[1], [0], [0], [1], [0, 0, 1, 1], [], []>} : vector<2x32xf32>, vector<32x128xf32>, vector<2x128xf32> -> vector<2x128xf32>
    %125 = arith.addf %123, %124 : vector<2x128xf32>
    %126 = vector.broadcast %5 : vector<1x128xf32> to vector<2x128xf32>
    %127 = arith.addf %125, %126 : vector<2x128xf32>
    %cst_49 = arith.constant 6.660000e-01 : f32
    %128 = vector.broadcast %cst_49 : f32 to vector<2x128xf32>
    %129 = arith.mulf %128, %127 : vector<2x128xf32>
    %130 = math.tanh %129 : vector<2x128xf32>
    %cst_50 = arith.constant 1.715900e+00 : f32
    %131 = vector.broadcast %cst_50 : f32 to vector<2x128xf32>
    %132 = arith.mulf %131, %130 : vector<2x128xf32>
    %cst_51 = arith.constant dense<0.000000e+00> : vector<2x128xf32>
    %133 = tpu.matmul %132, %6, %cst_51 {dimension_numbers = #tpu.dot_dimension_numbers<[1], [0], [0], [1], [0, 0, 1, 1], [], []>} : vector<2x128xf32>, vector<128x128xf32>, vector<2x128xf32> -> vector<2x128xf32>
    %134 = vector.broadcast %7 : vector<1x128xf32> to vector<2x128xf32>
    %135 = arith.addf %133, %134 : vector<2x128xf32>
    %136 = vector.extract_strided_slice %135 {offsets = [0, 0], sizes = [2, 32], strides = [1, 1]} : vector<2x128xf32> to vector<2x32xf32>
    %137 = math.tanh %136 : vector<2x32xf32>
    %138 = vector.extract_strided_slice %135 {offsets = [0, 32], sizes = [2, 32], strides = [1, 1]} : vector<2x128xf32> to vector<2x32xf32>
    %139 = math.tanh %138 : vector<2x32xf32>
    %140 = vector.extract_strided_slice %135 {offsets = [0, 64], sizes = [2, 32], strides = [1, 1]} : vector<2x128xf32> to vector<2x32xf32>
    %141 = vector.extract_strided_slice %135 {offsets = [0, 96], sizes = [2, 32], strides = [1, 1]} : vector<2x128xf32> to vector<2x32xf32>
    %142 = arith.addf %140, %141 : vector<2x32xf32>
    %143 = arith.negf %142 : vector<2x32xf32>
    %144 = math.exp %143 : vector<2x32xf32>
    %cst_52 = arith.constant 1.000000e+00 : f32
    %145 = vector.broadcast %cst_52 : f32 to vector<2x32xf32>
    %146 = arith.addf %145, %144 : vector<2x32xf32>
    %147 = arith.divf %145, %146 : vector<2x32xf32>
    %cst_53 = arith.constant 1.000000e+00 : f32
    %148 = vector.broadcast %cst_53 : f32 to vector<2x32xf32>
    %149 = arith.subf %148, %147 : vector<2x32xf32>
    %150 = arith.mulf %137, %149 : vector<2x32xf32>
    %151 = arith.mulf %147, %139 : vector<2x32xf32>
    %152 = arith.addf %150, %151 : vector<2x32xf32>
    %c0_54 = arith.constant 0 : index
    %153 = arith.index_cast %c3_i32 : i32 to index
    %c0_55 = arith.constant 0 : index
    %154 = vector.load %arg7[%c0_54, %153, %c0_55] : memref<2x8x32xf32, #tpu.memory_space<vmem>>, vector<2x1x32xf32>
    %155 = vector.shape_cast %154 : vector<2x1x32xf32> to vector<2x32xf32>
    %156 = vector.shape_cast %152 : vector<2x32xf32> to vector<2x1x32xf32>
    tpu.vector_store %arg7[%c0_54, %153, %c0_55], %156 {strides = array<i32>} : memref<2x8x32xf32, #tpu.memory_space<vmem>>, vector<2x1x32xf32>,
    %c4_i32 = arith.constant 4 : i32
    %c0_56 = arith.constant 0 : index
    %157 = arith.index_cast %c4_i32 : i32 to index
    %c0_57 = arith.constant 0 : index
    %158 = vector.load %arg1[%c0_56, %157, %c0_57] : memref<2x8x4xf32, #tpu.memory_space<vmem>>, vector<2x1x4xf32>
    %159 = vector.shape_cast %158 : vector<2x1x4xf32> to vector<2x4xf32>
    %cst_58 = arith.constant dense<0.000000e+00> : vector<2x128xf32>
    %160 = tpu.matmul %159, %3, %cst_58 {dimension_numbers = #tpu.dot_dimension_numbers<[1], [0], [0], [1], [0, 0, 1, 1], [], []>} : vector<2x4xf32>, vector<4x128xf32>, vector<2x128xf32> -> vector<2x128xf32>
    %cst_59 = arith.constant dense<0.000000e+00> : vector<2x128xf32>
    %161 = tpu.matmul %152, %4, %cst_59 {dimension_numbers = #tpu.dot_dimension_numbers<[1], [0], [0], [1], [0, 0, 1, 1], [], []>} : vector<2x32xf32>, vector<32x128xf32>, vector<2x128xf32> -> vector<2x128xf32>
    %162 = arith.addf %160, %161 : vector<2x128xf32>
    %163 = vector.broadcast %5 : vector<1x128xf32> to vector<2x128xf32>
    %164 = arith.addf %162, %163 : vector<2x128xf32>
    %cst_60 = arith.constant 6.660000e-01 : f32
    %165 = vector.broadcast %cst_60 : f32 to vector<2x128xf32>
    %166 = arith.mulf %165, %164 : vector<2x128xf32>
    %167 = math.tanh %166 : vector<2x128xf32>
    %cst_61 = arith.constant 1.715900e+00 : f32
    %168 = vector.broadcast %cst_61 : f32 to vector<2x128xf32>
    %169 = arith.mulf %168, %167 : vector<2x128xf32>
    %cst_62 = arith.constant dense<0.000000e+00> : vector<2x128xf32>
    %170 = tpu.matmul %169, %6, %cst_62 {dimension_numbers = #tpu.dot_dimension_numbers<[1], [0], [0], [1], [0, 0, 1, 1], [], []>} : vector<2x128xf32>, vector<128x128xf32>, vector<2x128xf32> -> vector<2x128xf32>
    %171 = vector.broadcast %7 : vector<1x128xf32> to vector<2x128xf32>
    %172 = arith.addf %170, %171 : vector<2x128xf32>
    %173 = vector.extract_strided_slice %172 {offsets = [0, 0], sizes = [2, 32], strides = [1, 1]} : vector<2x128xf32> to vector<2x32xf32>
    %174 = math.tanh %173 : vector<2x32xf32>
    %175 = vector.extract_strided_slice %172 {offsets = [0, 32], sizes = [2, 32], strides = [1, 1]} : vector<2x128xf32> to vector<2x32xf32>
    %176 = math.tanh %175 : vector<2x32xf32>
    %177 = vector.extract_strided_slice %172 {offsets = [0, 64], sizes = [2, 32], strides = [1, 1]} : vector<2x128xf32> to vector<2x32xf32>
    %178 = vector.extract_strided_slice %172 {offsets = [0, 96], sizes = [2, 32], strides = [1, 1]} : vector<2x128xf32> to vector<2x32xf32>
    %179 = arith.addf %177, %178 : vector<2x32xf32>
    %180 = arith.negf %179 : vector<2x32xf32>
    %181 = math.exp %180 : vector<2x32xf32>
    %cst_63 = arith.constant 1.000000e+00 : f32
    %182 = vector.broadcast %cst_63 : f32 to vector<2x32xf32>
    %183 = arith.addf %182, %181 : vector<2x32xf32>
    %184 = arith.divf %182, %183 : vector<2x32xf32>
    %cst_64 = arith.constant 1.000000e+00 : f32
    %185 = vector.broadcast %cst_64 : f32 to vector<2x32xf32>
    %186 = arith.subf %185, %184 : vector<2x32xf32>
    %187 = arith.mulf %174, %186 : vector<2x32xf32>
    %188 = arith.mulf %184, %176 : vector<2x32xf32>
    %189 = arith.addf %187, %188 : vector<2x32xf32>
    %c0_65 = arith.constant 0 : index
    %190 = arith.index_cast %c4_i32 : i32 to index
    %c0_66 = arith.constant 0 : index
    %191 = vector.load %arg7[%c0_65, %190, %c0_66] : memref<2x8x32xf32, #tpu.memory_space<vmem>>, vector<2x1x32xf32>
    %192 = vector.shape_cast %191 : vector<2x1x32xf32> to vector<2x32xf32>
    %193 = vector.shape_cast %189 : vector<2x32xf32> to vector<2x1x32xf32>
    tpu.vector_store %arg7[%c0_65, %190, %c0_66], %193 {strides = array<i32>} : memref<2x8x32xf32, #tpu.memory_space<vmem>>, vector<2x1x32xf32>,
    %c5_i32 = arith.constant 5 : i32
    %c0_67 = arith.constant 0 : index
    %194 = arith.index_cast %c5_i32 : i32 to index
    %c0_68 = arith.constant 0 : index
    %195 = vector.load %arg1[%c0_67, %194, %c0_68] : memref<2x8x4xf32, #tpu.memory_space<vmem>>, vector<2x1x4xf32>
    %196 = vector.shape_cast %195 : vector<2x1x4xf32> to vector<2x4xf32>
    %cst_69 = arith.constant dense<0.000000e+00> : vector<2x128xf32>
    %197 = tpu.matmul %196, %3, %cst_69 {dimension_numbers = #tpu.dot_dimension_numbers<[1], [0], [0], [1], [0, 0, 1, 1], [], []>} : vector<2x4xf32>, vector<4x128xf32>, vector<2x128xf32> -> vector<2x128xf32>
    %cst_70 = arith.constant dense<0.000000e+00> : vector<2x128xf32>
    %198 = tpu.matmul %189, %4, %cst_70 {dimension_numbers = #tpu.dot_dimension_numbers<[1], [0], [0], [1], [0, 0, 1, 1], [], []>} : vector<2x32xf32>, vector<32x128xf32>, vector<2x128xf32> -> vector<2x128xf32>
    %199 = arith.addf %197, %198 : vector<2x128xf32>
    %200 = vector.broadcast %5 : vector<1x128xf32> to vector<2x128xf32>
    %201 = arith.addf %199, %200 : vector<2x128xf32>
    %cst_71 = arith.constant 6.660000e-01 : f32
    %202 = vector.broadcast %cst_71 : f32 to vector<2x128xf32>
    %203 = arith.mulf %202, %201 : vector<2x128xf32>
    %204 = math.tanh %203 : vector<2x128xf32>
    %cst_72 = arith.constant 1.715900e+00 : f32
    %205 = vector.broadcast %cst_72 : f32 to vector<2x128xf32>
    %206 = arith.mulf %205, %204 : vector<2x128xf32>
    %cst_73 = arith.constant dense<0.000000e+00> : vector<2x128xf32>
    %207 = tpu.matmul %206, %6, %cst_73 {dimension_numbers = #tpu.dot_dimension_numbers<[1], [0], [0], [1], [0, 0, 1, 1], [], []>} : vector<2x128xf32>, vector<128x128xf32>, vector<2x128xf32> -> vector<2x128xf32>
    %208 = vector.broadcast %7 : vector<1x128xf32> to vector<2x128xf32>
    %209 = arith.addf %207, %208 : vector<2x128xf32>
    %210 = vector.extract_strided_slice %209 {offsets = [0, 0], sizes = [2, 32], strides = [1, 1]} : vector<2x128xf32> to vector<2x32xf32>
    %211 = math.tanh %210 : vector<2x32xf32>
    %212 = vector.extract_strided_slice %209 {offsets = [0, 32], sizes = [2, 32], strides = [1, 1]} : vector<2x128xf32> to vector<2x32xf32>
    %213 = math.tanh %212 : vector<2x32xf32>
    %214 = vector.extract_strided_slice %209 {offsets = [0, 64], sizes = [2, 32], strides = [1, 1]} : vector<2x128xf32> to vector<2x32xf32>
    %215 = vector.extract_strided_slice %209 {offsets = [0, 96], sizes = [2, 32], strides = [1, 1]} : vector<2x128xf32> to vector<2x32xf32>
    %216 = arith.addf %214, %215 : vector<2x32xf32>
    %217 = arith.negf %216 : vector<2x32xf32>
    %218 = math.exp %217 : vector<2x32xf32>
    %cst_74 = arith.constant 1.000000e+00 : f32
    %219 = vector.broadcast %cst_74 : f32 to vector<2x32xf32>
    %220 = arith.addf %219, %218 : vector<2x32xf32>
    %221 = arith.divf %219, %220 : vector<2x32xf32>
    %cst_75 = arith.constant 1.000000e+00 : f32
    %222 = vector.broadcast %cst_75 : f32 to vector<2x32xf32>
    %223 = arith.subf %222, %221 : vector<2x32xf32>
    %224 = arith.mulf %211, %223 : vector<2x32xf32>
    %225 = arith.mulf %221, %213 : vector<2x32xf32>
    %226 = arith.addf %224, %225 : vector<2x32xf32>
    %c0_76 = arith.constant 0 : index
    %227 = arith.index_cast %c5_i32 : i32 to index
    %c0_77 = arith.constant 0 : index
    %228 = vector.load %arg7[%c0_76, %227, %c0_77] : memref<2x8x32xf32, #tpu.memory_space<vmem>>, vector<2x1x32xf32>
    %229 = vector.shape_cast %228 : vector<2x1x32xf32> to vector<2x32xf32>
    %230 = vector.shape_cast %226 : vector<2x32xf32> to vector<2x1x32xf32>
    tpu.vector_store %arg7[%c0_76, %227, %c0_77], %230 {strides = array<i32>} : memref<2x8x32xf32, #tpu.memory_space<vmem>>, vector<2x1x32xf32>,
    %c6_i32 = arith.constant 6 : i32
    %c0_78 = arith.constant 0 : index
    %231 = arith.index_cast %c6_i32 : i32 to index
    %c0_79 = arith.constant 0 : index
    %232 = vector.load %arg1[%c0_78, %231, %c0_79] : memref<2x8x4xf32, #tpu.memory_space<vmem>>, vector<2x1x4xf32>
    %233 = vector.shape_cast %232 : vector<2x1x4xf32> to vector<2x4xf32>
    %cst_80 = arith.constant dense<0.000000e+00> : vector<2x128xf32>
    %234 = tpu.matmul %233, %3, %cst_80 {dimension_numbers = #tpu.dot_dimension_numbers<[1], [0], [0], [1], [0, 0, 1, 1], [], []>} : vector<2x4xf32>, vector<4x128xf32>, vector<2x128xf32> -> vector<2x128xf32>
    %cst_81 = arith.constant dense<0.000000e+00> : vector<2x128xf32>
    %235 = tpu.matmul %226, %4, %cst_81 {dimension_numbers = #tpu.dot_dimension_numbers<[1], [0], [0], [1], [0, 0, 1, 1], [], []>} : vector<2x32xf32>, vector<32x128xf32>, vector<2x128xf32> -> vector<2x128xf32>
    %236 = arith.addf %234, %235 : vector<2x128xf32>
    %237 = vector.broadcast %5 : vector<1x128xf32> to vector<2x128xf32>
    %238 = arith.addf %236, %237 : vector<2x128xf32>
    %cst_82 = arith.constant 6.660000e-01 : f32
    %239 = vector.broadcast %cst_82 : f32 to vector<2x128xf32>
    %240 = arith.mulf %239, %238 : vector<2x128xf32>
    %241 = math.tanh %240 : vector<2x128xf32>
    %cst_83 = arith.constant 1.715900e+00 : f32
    %242 = vector.broadcast %cst_83 : f32 to vector<2x128xf32>
    %243 = arith.mulf %242, %241 : vector<2x128xf32>
    %cst_84 = arith.constant dense<0.000000e+00> : vector<2x128xf32>
    %244 = tpu.matmul %243, %6, %cst_84 {dimension_numbers = #tpu.dot_dimension_numbers<[1], [0], [0], [1], [0, 0, 1, 1], [], []>} : vector<2x128xf32>, vector<128x128xf32>, vector<2x128xf32> -> vector<2x128xf32>
    %245 = vector.broadcast %7 : vector<1x128xf32> to vector<2x128xf32>
    %246 = arith.addf %244, %245 : vector<2x128xf32>
    %247 = vector.extract_strided_slice %246 {offsets = [0, 0], sizes = [2, 32], strides = [1, 1]} : vector<2x128xf32> to vector<2x32xf32>
    %248 = math.tanh %247 : vector<2x32xf32>
    %249 = vector.extract_strided_slice %246 {offsets = [0, 32], sizes = [2, 32], strides = [1, 1]} : vector<2x128xf32> to vector<2x32xf32>
    %250 = math.tanh %249 : vector<2x32xf32>
    %251 = vector.extract_strided_slice %246 {offsets = [0, 64], sizes = [2, 32], strides = [1, 1]} : vector<2x128xf32> to vector<2x32xf32>
    %252 = vector.extract_strided_slice %246 {offsets = [0, 96], sizes = [2, 32], strides = [1, 1]} : vector<2x128xf32> to vector<2x32xf32>
    %253 = arith.addf %251, %252 : vector<2x32xf32>
    %254 = arith.negf %253 : vector<2x32xf32>
    %255 = math.exp %254 : vector<2x32xf32>
    %cst_85 = arith.constant 1.000000e+00 : f32
    %256 = vector.broadcast %cst_85 : f32 to vector<2x32xf32>
    %257 = arith.addf %256, %255 : vector<2x32xf32>
    %258 = arith.divf %256, %257 : vector<2x32xf32>
    %cst_86 = arith.constant 1.000000e+00 : f32
    %259 = vector.broadcast %cst_86 : f32 to vector<2x32xf32>
    %260 = arith.subf %259, %258 : vector<2x32xf32>
    %261 = arith.mulf %248, %260 : vector<2x32xf32>
    %262 = arith.mulf %258, %250 : vector<2x32xf32>
    %263 = arith.addf %261, %262 : vector<2x32xf32>
    %c0_87 = arith.constant 0 : index
    %264 = arith.index_cast %c6_i32 : i32 to index
    %c0_88 = arith.constant 0 : index
    %265 = vector.load %arg7[%c0_87, %264, %c0_88] : memref<2x8x32xf32, #tpu.memory_space<vmem>>, vector<2x1x32xf32>
    %266 = vector.shape_cast %265 : vector<2x1x32xf32> to vector<2x32xf32>
    %267 = vector.shape_cast %263 : vector<2x32xf32> to vector<2x1x32xf32>
    tpu.vector_store %arg7[%c0_87, %264, %c0_88], %267 {strides = array<i32>} : memref<2x8x32xf32, #tpu.memory_space<vmem>>, vector<2x1x32xf32>,
    %c7_i32 = arith.constant 7 : i32
    %c0_89 = arith.constant 0 : index
    %268 = arith.index_cast %c7_i32 : i32 to index
    %c0_90 = arith.constant 0 : index
    %269 = vector.load %arg1[%c0_89, %268, %c0_90] : memref<2x8x4xf32, #tpu.memory_space<vmem>>, vector<2x1x4xf32>
    %270 = vector.shape_cast %269 : vector<2x1x4xf32> to vector<2x4xf32>
    %cst_91 = arith.constant dense<0.000000e+00> : vector<2x128xf32>
    %271 = tpu.matmul %270, %3, %cst_91 {dimension_numbers = #tpu.dot_dimension_numbers<[1], [0], [0], [1], [0, 0, 1, 1], [], []>} : vector<2x4xf32>, vector<4x128xf32>, vector<2x128xf32> -> vector<2x128xf32>
    %cst_92 = arith.constant dense<0.000000e+00> : vector<2x128xf32>
    %272 = tpu.matmul %263, %4, %cst_92 {dimension_numbers = #tpu.dot_dimension_numbers<[1], [0], [0], [1], [0, 0, 1, 1], [], []>} : vector<2x32xf32>, vector<32x128xf32>, vector<2x128xf32> -> vector<2x128xf32>
    %273 = arith.addf %271, %272 : vector<2x128xf32>
    %274 = vector.broadcast %5 : vector<1x128xf32> to vector<2x128xf32>
    %275 = arith.addf %273, %274 : vector<2x128xf32>
    %cst_93 = arith.constant 6.660000e-01 : f32
    %276 = vector.broadcast %cst_93 : f32 to vector<2x128xf32>
    %277 = arith.mulf %276, %275 : vector<2x128xf32>
    %278 = math.tanh %277 : vector<2x128xf32>
    %cst_94 = arith.constant 1.715900e+00 : f32
    %279 = vector.broadcast %cst_94 : f32 to vector<2x128xf32>
    %280 = arith.mulf %279, %278 : vector<2x128xf32>
    %cst_95 = arith.constant dense<0.000000e+00> : vector<2x128xf32>
    %281 = tpu.matmul %280, %6, %cst_95 {dimension_numbers = #tpu.dot_dimension_numbers<[1], [0], [0], [1], [0, 0, 1, 1], [], []>} : vector<2x128xf32>, vector<128x128xf32>, vector<2x128xf32> -> vector<2x128xf32>
    %282 = vector.broadcast %7 : vector<1x128xf32> to vector<2x128xf32>
    %283 = arith.addf %281, %282 : vector<2x128xf32>
    %284 = vector.extract_strided_slice %283 {offsets = [0, 0], sizes = [2, 32], strides = [1, 1]} : vector<2x128xf32> to vector<2x32xf32>
    %285 = math.tanh %284 : vector<2x32xf32>
    %286 = vector.extract_strided_slice %283 {offsets = [0, 32], sizes = [2, 32], strides = [1, 1]} : vector<2x128xf32> to vector<2x32xf32>
    %287 = math.tanh %286 : vector<2x32xf32>
    %288 = vector.extract_strided_slice %283 {offsets = [0, 64], sizes = [2, 32], strides = [1, 1]} : vector<2x128xf32> to vector<2x32xf32>
    %289 = vector.extract_strided_slice %283 {offsets = [0, 96], sizes = [2, 32], strides = [1, 1]} : vector<2x128xf32> to vector<2x32xf32>
    %290 = arith.addf %288, %289 : vector<2x32xf32>
    %291 = arith.negf %290 : vector<2x32xf32>
    %292 = math.exp %291 : vector<2x32xf32>
    %cst_96 = arith.constant 1.000000e+00 : f32
    %293 = vector.broadcast %cst_96 : f32 to vector<2x32xf32>
    %294 = arith.addf %293, %292 : vector<2x32xf32>
    %295 = arith.divf %293, %294 : vector<2x32xf32>
    %cst_97 = arith.constant 1.000000e+00 : f32
    %296 = vector.broadcast %cst_97 : f32 to vector<2x32xf32>
    %297 = arith.subf %296, %295 : vector<2x32xf32>
    %298 = arith.mulf %285, %297 : vector<2x32xf32>
    %299 = arith.mulf %295, %287 : vector<2x32xf32>
    %300 = arith.addf %298, %299 : vector<2x32xf32>
    %c0_98 = arith.constant 0 : index
    %301 = arith.index_cast %c7_i32 : i32 to index
    %c0_99 = arith.constant 0 : index
    %302 = vector.load %arg7[%c0_98, %301, %c0_99] : memref<2x8x32xf32, #tpu.memory_space<vmem>>, vector<2x1x32xf32>
    %303 = vector.shape_cast %302 : vector<2x1x32xf32> to vector<2x32xf32>
    %304 = vector.shape_cast %300 : vector<2x32xf32> to vector<2x1x32xf32>
    tpu.vector_store %arg7[%c0_98, %301, %c0_99], %304 {strides = array<i32>} : memref<2x8x32xf32, #tpu.memory_space<vmem>>, vector<2x1x32xf32>,
    %c8_i32 = arith.constant 8 : i32
    %c0_100 = arith.constant 0 : index
    %c0_101 = arith.constant 0 : index
    %305 = vector.load %arg8[%c0_100, %c0_101] : memref<2x32xf32, #tpu.memory_space<vmem>>, vector<2x32xf32>
    tpu.vector_store %arg8[%c0_100, %c0_101], %300 {strides = array<i32>} : memref<2x32xf32, #tpu.memory_space<vmem>>, vector<2x32xf32>,
    return
  }
  func.func @transform_0(%arg0: i32) -> (i32, i32, i32) {
    %c0_i32 = arith.constant 0 : i32
    %c0_i32_0 = arith.constant 0 : i32
    %c0_i32_1 = arith.constant 0 : i32
    return %c0_i32, %arg0, %c0_i32_0 : i32, i32, i32
  }
  func.func @transform_1(%arg0: i32) -> (i32, i32) {
    %c0_i32 = arith.constant 0 : i32
    %c0_i32_0 = arith.constant 0 : i32
    %c0_i32_1 = arith.constant 0 : i32
    return %c0_i32, %c0_i32_0 : i32, i32
  }
  func.func @transform_2(%arg0: i32) -> (i32, i32) {
    %c0_i32 = arith.constant 0 : i32
    %c0_i32_0 = arith.constant 0 : i32
    %c0_i32_1 = arith.constant 0 : i32
    return %c0_i32, %c0_i32_0 : i32, i32
  }
  func.func @transform_3(%arg0: i32) -> (i32, i32) {
    %c0_i32 = arith.constant 0 : i32
    %c0_i32_0 = arith.constant 0 : i32
    %c0_i32_1 = arith.constant 0 : i32
    return %c0_i32, %c0_i32_0 : i32, i32
  }
  func.func @transform_4(%arg0: i32) -> (i32, i32) {
    %c0_i32 = arith.constant 0 : i32
    %c0_i32_0 = arith.constant 0 : i32
    %c0_i32_1 = arith.constant 0 : i32
    return %c0_i32, %c0_i32_0 : i32, i32
  }
  func.func @transform_5(%arg0: i32) -> (i32, i32) {
    %c0_i32 = arith.constant 0 : i32
    %c0_i32_0 = arith.constant 0 : i32
    %c0_i32_1 = arith.constant 0 : i32
    return %c0_i32, %c0_i32_0 : i32, i32
  }
  func.func @transform_6(%arg0: i32) -> (i32, i32, i32) {
    %c0_i32 = arith.constant 0 : i32
    %c0_i32_0 = arith.constant 0 : i32
    %c0_i32_1 = arith.constant 0 : i32
    return %c0_i32, %arg0, %c0_i32_0 : i32, i32, i32
  }
}

</mosaic_0001>

<llo_original>
// kernel: tpu_custom_call.1
$region0: #{tpu_custom_call.1}
  #allocation0 [shape = 'u32[]', space=smem, size = 0x4, offset = 0x4, fixed_abs, tag = 'smem constant byte address 0x4 - core index']
  #allocation1 [shape = 'u32[72,128]{1,0:T(1,128)}', space=vmem, size = 0x9000, scoped, tag = 'internal scratch']
  #allocation2 [shape = 'f32[2,32]{1,0:T(2,128)}', space=vmem, size = 0x400, scoped, tag = 'scratch operand']
  %s0 = inlined_call_operand.vmem [shape: f32[2,8,4], index: 0, kind: input, shape index: {}]
  %s1 = inlined_call_operand.vmem [shape: f32[4,128], index: 1, kind: input, shape index: {}]
  %s2 = inlined_call_operand.hbm [shape: f32[32,128], index: 2, kind: input, shape index: {}]
  %s3 = inlined_call_operand.vmem [shape: f32[1,128], index: 3, kind: input, shape index: {}]
  %s4 = inlined_call_operand.hbm [shape: f32[128,128], index: 4, kind: input, shape index: {}]
  %s5 = inlined_call_operand.vmem [shape: f32[1,128], index: 5, kind: input, shape index: {}]
  %s6 = inlined_call_operand.hbm [shape: f32[2,8,32], index: 6, kind: output, shape index: {}]
  %s7 = sld [smem:[#allocation0]]
  $region46: #{tpu_custom_call.1} parent=0
    _
  %s9 = ssub.s32 1, %s7
  %s10 = scalar_select 0, %s9, %s7
  $region1: #{tpu_custom_call.1} parent=0
    #allocation3 [shape = 'u8[16384]{0}', space=vmem, size = 0x4000, scoped, tag = 'input window, operand 2, single buffered']
    #allocation4 [shape = 's32[1]{0}', space=sflag, size = 0x4, scoped, tag = 'scoped memory for tpu_custom_call.1']
    #allocation5 [shape = 's32[1]{0}', space=sflag, size = 0x4, scoped, tag = 'scoped memory for tpu_custom_call.1']
    #allocation6 [shape = 'u8[65536]{0}', space=vmem, size = 0x10000, scoped, tag = 'input window, operand 4, single buffered']
    #allocation7 [shape = 's32[1]{0}', space=sflag, size = 0x4, scoped, tag = 'scoped memory for tpu_custom_call.1']
    #allocation8 [shape = 'u8[8192]{0}', space=vmem, size = 0x2000, scoped, tag = 'output window, operand 0, single buffered']
    %11 = vsyncpa [#allocation4], 0
    %12 = vsyncpa [#allocation7], 0
    %13 = vsyncpa [#allocation5], 0
    // Predicated region
    $region2: #{tpu_custom_call.1} parent=1 // pred_check
      _
    $region3: #{tpu_custom_call.1} parent=1 // pred_check_branch
      %15 = sbr.rel (0) target = $region5
    $region4: #{tpu_custom_call.1} parent=1 // pred_region
      _
    $region5: #{tpu_custom_call.1} parent=1 // pred_fallthru
      _
    // Predicated region
    $region6: #{tpu_custom_call.1} parent=1 // pred_check
      _
    $region7: #{tpu_custom_call.1} parent=1 // pred_check_branch
      %17 = sbr.rel (0) target = $region9
    $region8: #{tpu_custom_call.1} parent=1 // pred_region
      _
    $region9: #{tpu_custom_call.1} parent=1 // pred_fallthru
      _
    // Predicated region
    $region10: #{tpu_custom_call.1} parent=1 // pred_check
      _
    $region11: #{tpu_custom_call.1} parent=1 // pred_check_branch
      %19 = sbr.rel (0) target = $region13
    $region12: #{tpu_custom_call.1} parent=1 // pred_region
      %21 = vsyncadd [#allocation4], 0
      %s22 = sshll.u32 %s2, 4
      %s23 = int_to_ptr.hbm [resolvable:$true] %s22
      %s24 = sshll.u32 [#allocation3], 4
      %s25 = int_to_ptr.vmem [resolvable:$true] %s24
      %30 = dma.hbm_to_vmem [thread:$0]  %s23, 512, %s25, [#allocation4], 128, 128, 8
    $region13: #{tpu_custom_call.1} parent=1 // pred_fallthru
      _
    // Predicated region
    $region14: #{tpu_custom_call.1} parent=1 // pred_check
      _
    $region15: #{tpu_custom_call.1} parent=1 // pred_check_branch
      %32 = sbr.rel (0) target = $region17
    $region16: #{tpu_custom_call.1} parent=1 // pred_region
      _
    $region17: #{tpu_custom_call.1} parent=1 // pred_fallthru
      _
    // Predicated region
    $region18: #{tpu_custom_call.1} parent=1 // pred_check
      _
    $region19: #{tpu_custom_call.1} parent=1 // pred_check_branch
      %34 = sbr.rel (0) target = $region21
    $region20: #{tpu_custom_call.1} parent=1 // pred_region
      %36 = vsyncadd [#allocation7], 0
      %s37 = sshll.u32 %s4, 4
      %s38 = int_to_ptr.hbm [resolvable:$true] %s37
      %s39 = sshll.u32 [#allocation6], 4
      %s40 = int_to_ptr.vmem [resolvable:$true] %s39
      %45 = dma.hbm_to_vmem [thread:$0]  %s38, 2048, %s40, [#allocation7], 128, 128, 8
    $region21: #{tpu_custom_call.1} parent=1 // pred_fallthru
      _
    // Predicated region
    $region22: #{tpu_custom_call.1} parent=1 // pred_check
      _
    $region23: #{tpu_custom_call.1} parent=1 // pred_check_branch
      %47 = sbr.rel (0) target = $region25
    $region24: #{tpu_custom_call.1} parent=1 // pred_region
      _
    $region25: #{tpu_custom_call.1} parent=1 // pred_fallthru
      _
    // Predicated region
    $region26: #{tpu_custom_call.1} parent=1 // pred_check
      _
    $region27: #{tpu_custom_call.1} parent=1 // pred_check_branch
      %49 = sbr.rel (0) target = $region29
    $region28: #{tpu_custom_call.1} parent=1 // pred_region
      %51 = dma.done [#allocation4], 512
    $region29: #{tpu_custom_call.1} parent=1 // pred_fallthru
      _
    // Predicated region
    $region30: #{tpu_custom_call.1} parent=1 // pred_check
      _
    $region31: #{tpu_custom_call.1} parent=1 // pred_check_branch
      %53 = sbr.rel (0) target = $region33
    $region32: #{tpu_custom_call.1} parent=1 // pred_region
      %55 = dma.done [#allocation7], 2048
    $region33: #{tpu_custom_call.1} parent=1 // pred_fallthru
      _
    %p56 = scmp.eq.s32.totalorder 0, 0
    // Predicated region
    $region34: #{tpu_custom_call.1} parent=1 // pred_check
      %p57 = pneg %p56
    $region35: #{tpu_custom_call.1} parent=1 // pred_check_branch
      %59 = sbr.rel (%p57) target = $region37
    $region36: #{tpu_custom_call.1} parent=1 // pred_region
      %vm60 = vcmask 254976
      %61 = vst.msk [vmem:[#allocation2] sm:$0x3] %vm60, 0.0
    $region37: #{tpu_custom_call.1} parent=1 // pred_fallthru
      _
    %v62 = vld [vmem:[%s1] sm:$0xf]
    %v63 = vld [vmem:[#allocation3] sm:$0xff]
    %v64 = vld [vmem:[#allocation3 + $0x8] sm:$0xff]
    %v65 = vld [vmem:[#allocation3 + $0x10] sm:$0xff]
    %v66 = vld [vmem:[#allocation3 + $0x18] sm:$0xff]
    %v67 = vld [vmem:[%s3] sm:$0x1]
    %v68 = vld [vmem:[#allocation6] sm:$0xff]
    %v69 = vld [vmem:[#allocation6 + $0x8] sm:$0xff]
    %v70 = vld [vmem:[#allocation6 + $0x10] sm:$0xff]
    %v71 = vld [vmem:[#allocation6 + $0x18] sm:$0xff]
    %v72 = vld [vmem:[#allocation6 + $0x20] sm:$0xff]
    %v73 = vld [vmem:[#allocation6 + $0x28] sm:$0xff]
    %v74 = vld [vmem:[#allocation6 + $0x30] sm:$0xff]
    %v75 = vld [vmem:[#allocation6 + $0x38] sm:$0xff]
    %v76 = vld [vmem:[#allocation6 + $0x40] sm:$0xff]
    %v77 = vld [vmem:[#allocation6 + $0x48] sm:$0xff]
    %v78 = vld [vmem:[#allocation6 + $0x50] sm:$0xff]
    %v79 = vld [vmem:[#allocation6 + $0x58] sm:$0xff]
    %v80 = vld [vmem:[#allocation6 + $0x60] sm:$0xff]
    %v81 = vld [vmem:[#allocation6 + $0x68] sm:$0xff]
    %v82 = vld [vmem:[#allocation6 + $0x70] sm:$0xff]
    %v83 = vld [vmem:[#allocation6 + $0x78] sm:$0xff]
    %v84 = vld [vmem:[%s5] sm:$0x1]
    %v85 = vld [vmem:[#allocation2] sm:$0x3]
    %v86 = vld [vmem:[%s0] sm:$0x1]
    %v87 = vld [vmem:[%s0 + $0x8] sm:$0x1]
    %vm88 = vcmask 261120
    %v90 = vsel %vm88, %v85, 0
    %92 = vmatpush.msra.mxu0 0.0
    %93 = vmatpush.msra.mxu0 0.0
    %94 = vmatpush.msra.mxu0 0.0
    %95 = vmatpush.msra.mxu0 0.0
    %96 = vmatpush.msra.mxu0 0.0
    %97 = vmatpush.msra.mxu0 0.0
    %98 = vmatpush.msra.mxu0 0.0
    %99 = vmatpush.msra.mxu0 0.0
    %100 = vmatpush.msra.mxu0 0.0
    %101 = vmatpush.msra.mxu0 0.0
    %102 = vmatpush.msra.mxu0 0.0
    %103 = vmatpush.msra.mxu0 0.0
    %104 = vmatpush.msra.mxu0 %v66
    %105 = vmatpush.msra.mxu0 %v65
    %106 = vmatpush.msra.mxu0 %v64
    %107 = vmatpush.msra.mxu0 %v63
    %108 = vmatmul.f32.gmra.mxu0 %v90
    %v109 = vpop.f32.mrf.mxu0
    %v110 = vadd.f32 0.0, %v109
    %111 = vdwg.mxu0
    %v114 = vrot.slane %v87, 7
    %vm115 = vcmask 1041409
    %v116 = vsel %vm115, %v114, %v86
    %vm117 = vcmask 31744
    %v118 = vsel %vm117, %v116, 0
    %vm120 = vcmask 1043456
    %v122 = vsel %vm120, %v62, 0
    %124 = vmatpush.msra.mxu0 0.0
    %125 = vmatpush.msra.mxu0 0.0
    %126 = vmatpush.msra.mxu0 0.0
    %127 = vmatpush.msra.mxu0 0.0
    %128 = vmatpush.msra.mxu0 0.0
    %129 = vmatpush.msra.mxu0 0.0
    %130 = vmatpush.msra.mxu0 0.0
    %131 = vmatpush.msra.mxu0 0.0
    %132 = vmatpush.msra.mxu0 0.0
    %133 = vmatpush.msra.mxu0 0.0
    %134 = vmatpush.msra.mxu0 0.0
    %135 = vmatpush.msra.mxu0 0.0
    %136 = vmatpush.msra.mxu0 0.0
    %137 = vmatpush.msra.mxu0 0.0
    %138 = vmatpush.msra.mxu0 0.0
    %139 = vmatpush.msra.mxu0 %v122
    %140 = vmatmul.f32.gmra.mxu0 %v118
    %v141 = vpop.f32.mrf.mxu0
    %v142 = vadd.f32 %v110, %v141
    %143 = vdwg.mxu0
    %v145 = vperm.slane %v67, 0
    %v147 = vadd.f32 %v142, %v145
    %v148 = vmul.f32 %v147, 0.666
    %v149 = vtanh.pop %v148
    %v150 = vmul.f32 %v149, 1.7159
    %v152 = vperm.slane %v84, 0
    %154 = vmatpush.msra.mxu0 %v83
    %155 = vmatpush.msra.mxu0 %v82
    %156 = vmatpush.msra.mxu0 %v81
    %157 = vmatpush.msra.mxu0 %v80
    %158 = vmatpush.msra.mxu0 %v79
    %159 = vmatpush.msra.mxu0 %v78
    %160 = vmatpush.msra.mxu0 %v77
    %161 = vmatpush.msra.mxu0 %v76
    %162 = vmatpush.msra.mxu0 %v75
    %163 = vmatpush.msra.mxu0 %v74
    %164 = vmatpush.msra.mxu0 %v73
    %165 = vmatpush.msra.mxu0 %v72
    %166 = vmatpush.msra.mxu0 %v71
    %167 = vmatpush.msra.mxu0 %v70
    %168 = vmatpush.msra.mxu0 %v69
    %169 = vmatpush.msra.mxu0 %v68
    %170 = vmatmul.f32.gmra.mxu0 %v150
    %v171 = vpop.f32.mrf.mxu0
    %v172 = vadd.f32 %v152, %v171
    %173 = vdwg.mxu0
    %v174 = vtanh.pop %v172
    %176 = vrot.lane.b32.xlu0 %v172, 96
    %v177 = vpop.permute.xlu0 %176
    %v179 = vadd.f32 %v172, %v177
    %v180 = vxor.u32 %v179, 2147483648
    %v181 = vmul.f32 %v180, 1.442695
    %v182 = vpow.pop %v181
    %v183 = vadd.f32 %v182, 1.0
    %v184 = vrcp.pop %v183
    %v185 = vmul.f32 %v183, %v184
    %v186 = vsub.f32 1.0, %v185
    %v187 = vmul.f32 %v184, %v186
    %v188 = vadd.f32 %v184, %v187
    %vm189 = vweird.f32 %v183
    %vm190 = vweird.f32 %v184
    %vm191 = vmor %vm189, %vm190
    %v192 = vsel %vm191, %v184, %v188
    %v193 = vand.u32 2147483647, %v183
    %vm194 = vcmp.eq.f32.partialorder %v193, 8.507059e+37
    %v195 = vand.u32 %v183, 2147483648
    %v196 = vor.u32 1.1754944e-38, %v195
    %v197 = vsel %vm194, %v196, %v192
    %v198 = vmul.f32 1.0, %v197
    %v199 = vsub.f32 1.0, %v198
    %201 = vrot.lane.b32.xlu0 %v199, 64
    %v202 = vpop.permute.xlu0 %201
    %v204 = vmul.f32 %v174, %v202
    %206 = vrot.lane.b32.xlu0 %v174, 32
    %v207 = vpop.permute.xlu0 %206
    %v209 = vmul.f32 %v198, %v207
    %211 = vrot.lane.b32.xlu0 %v209, 64
    %v212 = vpop.permute.xlu0 %211
    %v214 = vadd.f32 %v204, %v212
    %v216 = vrot.slane %v214, 1
    %vm218 = vcmask 253952
    %219 = vst.msk [vmem:[#allocation8] sm:$0x1] %vm218, %v214
    %220 = vst.msk [vmem:[#allocation8 + $0x8] sm:$0x1] %vm218, %v216
    %v221 = vld [vmem:[%s0 + $0x1] sm:$0x1]
    %v222 = vld [vmem:[%s0 + $0x9] sm:$0x1]
    %v223 = vsel %vm88, %v214, 0
    %225 = vmatpush.msra.mxu0 0.0
    %226 = vmatpush.msra.mxu0 0.0
    %227 = vmatpush.msra.mxu0 0.0
    %228 = vmatpush.msra.mxu0 0.0
    %229 = vmatpush.msra.mxu0 0.0
    %230 = vmatpush.msra.mxu0 0.0
    %231 = vmatpush.msra.mxu0 0.0
    %232 = vmatpush.msra.mxu0 0.0
    %233 = vmatpush.msra.mxu0 0.0
    %234 = vmatpush.msra.mxu0 0.0
    %235 = vmatpush.msra.mxu0 0.0
    %236 = vmatpush.msra.mxu0 0.0
    %237 = vmatpush.msra.mxu0 %v66
    %238 = vmatpush.msra.mxu0 %v65
    %239 = vmatpush.msra.mxu0 %v64
    %240 = vmatpush.msra.mxu0 %v63
    %241 = vmatmul.f32.gmra.mxu0 %v223
    %v242 = vpop.f32.mrf.mxu0
    %v243 = vadd.f32 0.0, %v242
    %244 = vdwg.mxu0
    %v247 = vrot.slane %v222, 7
    %v248 = vsel %vm115, %v247, %v221
    %v249 = vsel %vm117, %v248, 0
    %251 = vmatpush.msra.mxu0 0.0
    %252 = vmatpush.msra.mxu0 0.0
    %253 = vmatpush.msra.mxu0 0.0
    %254 = vmatpush.msra.mxu0 0.0
    %255 = vmatpush.msra.mxu0 0.0
    %256 = vmatpush.msra.mxu0 0.0
    %257 = vmatpush.msra.mxu0 0.0
    %258 = vmatpush.msra.mxu0 0.0
    %259 = vmatpush.msra.mxu0 0.0
    %260 = vmatpush.msra.mxu0 0.0
    %261 = vmatpush.msra.mxu0 0.0
    %262 = vmatpush.msra.mxu0 0.0
    %263 = vmatpush.msra.mxu0 0.0
    %264 = vmatpush.msra.mxu0 0.0
    %265 = vmatpush.msra.mxu0 0.0
    %266 = vmatpush.msra.mxu0 %v122
    %267 = vmatmul.f32.gmra.mxu0 %v249
    %v268 = vpop.f32.mrf.mxu0
    %v269 = vadd.f32 %v243, %v268
    %270 = vdwg.mxu0
    %v271 = vadd.f32 %v269, %v145
    %v272 = vmul.f32 %v271, 0.666
    %v273 = vtanh.pop %v272
    %v274 = vmul.f32 %v273, 1.7159
    %275 = vmatpush.msra.mxu0 %v83
    %276 = vmatpush.msra.mxu0 %v82
    %277 = vmatpush.msra.mxu0 %v81
    %278 = vmatpush.msra.mxu0 %v80
    %279 = vmatpush.msra.mxu0 %v79
    %280 = vmatpush.msra.mxu0 %v78
    %281 = vmatpush.msra.mxu0 %v77
    %282 = vmatpush.msra.mxu0 %v76
    %283 = vmatpush.msra.mxu0 %v75
    %284 = vmatpush.msra.mxu0 %v74
    %285 = vmatpush.msra.mxu0 %v73
    %286 = vmatpush.msra.mxu0 %v72
    %287 = vmatpush.msra.mxu0 %v71
    %288 = vmatpush.msra.mxu0 %v70
    %289 = vmatpush.msra.mxu0 %v69
    %290 = vmatpush.msra.mxu0 %v68
    %291 = vmatmul.f32.gmra.mxu0 %v274
    %v292 = vpop.f32.mrf.mxu0
    %v293 = vadd.f32 %v152, %v292
    %294 = vdwg.mxu0
    %v295 = vtanh.pop %v293
    %297 = vrot.lane.b32.xlu0 %v293, 96
    %v298 = vpop.permute.xlu0 %297
    %v300 = vadd.f32 %v293, %v298
    %v301 = vxor.u32 %v300, 2147483648
    %v302 = vmul.f32 %v301, 1.442695
    %v303 = vpow.pop %v302
    %v304 = vadd.f32 %v303, 1.0
    %v305 = vrcp.pop %v304
    %v306 = vmul.f32 %v304, %v305
    %v307 = vsub.f32 1.0, %v306
    %v308 = vmul.f32 %v305, %v307
    %v309 = vadd.f32 %v305, %v308
    %vm310 = vweird.f32 %v304
    %vm311 = vweird.f32 %v305
    %vm312 = vmor %vm310, %vm311
    %v313 = vsel %vm312, %v305, %v309
    %v314 = vand.u32 2147483647, %v304
    %vm315 = vcmp.eq.f32.partialorder %v314, 8.507059e+37
    %v316 = vand.u32 %v304, 2147483648
    %v317 = vor.u32 1.1754944e-38, %v316
    %v318 = vsel %vm315, %v317, %v313
    %v319 = vmul.f32 1.0, %v318
    %v320 = vsub.f32 1.0, %v319
    %322 = vrot.lane.b32.xlu0 %v320, 64
    %v323 = vpop.permute.xlu0 %322
    %v325 = vmul.f32 %v295, %v323
    %327 = vrot.lane.b32.xlu0 %v295, 32
    %v328 = vpop.permute.xlu0 %327
    %v330 = vmul.f32 %v319, %v328
    %332 = vrot.lane.b32.xlu0 %v330, 64
    %v333 = vpop.permute.xlu0 %332
    %v335 = vadd.f32 %v325, %v333
    %v337 = vrot.slane %v335, 1
    %339 = vst.msk [vmem:[#allocation8 + $0x1] sm:$0x1] %vm218, %v335
    %340 = vst.msk [vmem:[#allocation8 + $0x9] sm:$0x1] %vm218, %v337
    %v341 = vld [vmem:[%s0 + $0x2] sm:$0x1]
    %v342 = vld [vmem:[%s0 + $0xa] sm:$0x1]
    %v343 = vsel %vm88, %v335, 0
    %345 = vmatpush.msra.mxu0 0.0
    %346 = vmatpush.msra.mxu0 0.0
    %347 = vmatpush.msra.mxu0 0.0
    %348 = vmatpush.msra.mxu0 0.0
    %349 = vmatpush.msra.mxu0 0.0
    %350 = vmatpush.msra.mxu0 0.0
    %351 = vmatpush.msra.mxu0 0.0
    %352 = vmatpush.msra.mxu0 0.0
    %353 = vmatpush.msra.mxu0 0.0
    %354 = vmatpush.msra.mxu0 0.0
    %355 = vmatpush.msra.mxu0 0.0
    %356 = vmatpush.msra.mxu0 0.0
    %357 = vmatpush.msra.mxu0 %v66
    %358 = vmatpush.msra.mxu0 %v65
    %359 = vmatpush.msra.mxu0 %v64
    %360 = vmatpush.msra.mxu0 %v63
    %361 = vmatmul.f32.gmra.mxu0 %v343
    %v362 = vpop.f32.mrf.mxu0
    %v363 = vadd.f32 0.0, %v362
    %364 = vdwg.mxu0
    %v367 = vrot.slane %v342, 7
    %v368 = vsel %vm115, %v367, %v341
    %v369 = vsel %vm117, %v368, 0
    %371 = vmatpush.msra.mxu0 0.0
    %372 = vmatpush.msra.mxu0 0.0
    %373 = vmatpush.msra.mxu0 0.0
    %374 = vmatpush.msra.mxu0 0.0
    %375 = vmatpush.msra.mxu0 0.0
    %376 = vmatpush.msra.mxu0 0.0
    %377 = vmatpush.msra.mxu0 0.0
    %378 = vmatpush.msra.mxu0 0.0
    %379 = vmatpush.msra.mxu0 0.0
    %380 = vmatpush.msra.mxu0 0.0
    %381 = vmatpush.msra.mxu0 0.0
    %382 = vmatpush.msra.mxu0 0.0
    %383 = vmatpush.msra.mxu0 0.0
    %384 = vmatpush.msra.mxu0 0.0
    %385 = vmatpush.msra.mxu0 0.0
    %386 = vmatpush.msra.mxu0 %v122
    %387 = vmatmul.f32.gmra.mxu0 %v369
    %v388 = vpop.f32.mrf.mxu0
    %v389 = vadd.f32 %v363, %v388
    %390 = vdwg.mxu0
    %v391 = vadd.f32 %v389, %v145
    %v392 = vmul.f32 %v391, 0.666
    %v393 = vtanh.pop %v392
    %v394 = vmul.f32 %v393, 1.7159
    %395 = vmatpush.msra.mxu0 %v83
    %396 = vmatpush.msra.mxu0 %v82
    %397 = vmatpush.msra.mxu0 %v81
    %398 = vmatpush.msra.mxu0 %v80
    %399 = vmatpush.msra.mxu0 %v79
    %400 = vmatpush.msra.mxu0 %v78
    %401 = vmatpush.msra.mxu0 %v77
    %402 = vmatpush.msra.mxu0 %v76
    %403 = vmatpush.msra.mxu0 %v75
    %404 = vmatpush.msra.mxu0 %v74
    %405 = vmatpush.msra.mxu0 %v73
    %406 = vmatpush.msra.mxu0 %v72
    %407 = vmatpush.msra.mxu0 %v71
    %408 = vmatpush.msra.mxu0 %v70
    %409 = vmatpush.msra.mxu0 %v69
    %410 = vmatpush.msra.mxu0 %v68
    %411 = vmatmul.f32.gmra.mxu0 %v394
    %v412 = vpop.f32.mrf.mxu0
    %v413 = vadd.f32 %v152, %v412
    %414 = vdwg.mxu0
    %v415 = vtanh.pop %v413
    %417 = vrot.lane.b32.xlu0 %v413, 96
    %v418 = vpop.permute.xlu0 %417
    %v420 = vadd.f32 %v413, %v418
    %v421 = vxor.u32 %v420, 2147483648
    %v422 = vmul.f32 %v421, 1.442695
    %v423 = vpow.pop %v422
    %v424 = vadd.f32 %v423, 1.0
    %v425 = vrcp.pop %v424
    %v426 = vmul.f32 %v424, %v425
    %v427 = vsub.f32 1.0, %v426
    %v428 = vmul.f32 %v425, %v427
    %v429 = vadd.f32 %v425, %v428
    %vm430 = vweird.f32 %v424
    %vm431 = vweird.f32 %v425
    %vm432 = vmor %vm430, %vm431
    %v433 = vsel %vm432, %v425, %v429
    %v434 = vand.u32 2147483647, %v424
    %vm435 = vcmp.eq.f32.partialorder %v434, 8.507059e+37
    %v436 = vand.u32 %v424, 2147483648
    %v437 = vor.u32 1.1754944e-38, %v436
    %v438 = vsel %vm435, %v437, %v433
    %v439 = vmul.f32 1.0, %v438
    %v440 = vsub.f32 1.0, %v439
    %442 = vrot.lane.b32.xlu0 %v440, 64
    %v443 = vpop.permute.xlu0 %442
    %v445 = vmul.f32 %v415, %v443
    %447 = vrot.lane.b32.xlu0 %v415, 32
    %v448 = vpop.permute.xlu0 %447
    %v450 = vmul.f32 %v439, %v448
    %452 = vrot.lane.b32.xlu0 %v450, 64
    %v453 = vpop.permute.xlu0 %452
    %v455 = vadd.f32 %v445, %v453
    %v457 = vrot.slane %v455, 1
    %459 = vst.msk [vmem:[#allocation8 + $0x2] sm:$0x1] %vm218, %v455
    %460 = vst.msk [vmem:[#allocation8 + $0xa] sm:$0x1] %vm218, %v457
    %v461 = vld [vmem:[%s0 + $0x3] sm:$0x1]
    %v462 = vld [vmem:[%s0 + $0xb] sm:$0x1]
    %v463 = vsel %vm88, %v455, 0
    %465 = vmatpush.msra.mxu0 0.0
    %466 = vmatpush.msra.mxu0 0.0
    %467 = vmatpush.msra.mxu0 0.0
    %468 = vmatpush.msra.mxu0 0.0
    %469 = vmatpush.msra.mxu0 0.0
    %470 = vmatpush.msra.mxu0 0.0
    %471 = vmatpush.msra.mxu0 0.0
    %472 = vmatpush.msra.mxu0 0.0
    %473 = vmatpush.msra.mxu0 0.0
    %474 = vmatpush.msra.mxu0 0.0
    %475 = vmatpush.msra.mxu0 0.0
    %476 = vmatpush.msra.mxu0 0.0
    %477 = vmatpush.msra.mxu0 %v66
    %478 = vmatpush.msra.mxu0 %v65
    %479 = vmatpush.msra.mxu0 %v64
    %480 = vmatpush.msra.mxu0 %v63
    %481 = vmatmul.f32.gmra.mxu0 %v463
    %v482 = vpop.f32.mrf.mxu0
    %v483 = vadd.f32 0.0, %v482
    %484 = vdwg.mxu0
    %v487 = vrot.slane %v462, 7
    %v488 = vsel %vm115, %v487, %v461
    %v489 = vsel %vm117, %v488, 0
    %491 = vmatpush.msra.mxu0 0.0
    %492 = vmatpush.msra.mxu0 0.0
    %493 = vmatpush.msra.mxu0 0.0
    %494 = vmatpush.msra.mxu0 0.0
    %495 = vmatpush.msra.mxu0 0.0
    %496 = vmatpush.msra.mxu0 0.0
    %497 = vmatpush.msra.mxu0 0.0
    %498 = vmatpush.msra.mxu0 0.0
    %499 = vmatpush.msra.mxu0 0.0
    %500 = vmatpush.msra.mxu0 0.0
    %501 = vmatpush.msra.mxu0 0.0
    %502 = vmatpush.msra.mxu0 0.0
    %503 = vmatpush.msra.mxu0 0.0
    %504 = vmatpush.msra.mxu0 0.0
    %505 = vmatpush.msra.mxu0 0.0
    %506 = vmatpush.msra.mxu0 %v122
    %507 = vmatmul.f32.gmra.mxu0 %v489
    %v508 = vpop.f32.mrf.mxu0
    %v509 = vadd.f32 %v483, %v508
    %510 = vdwg.mxu0
    %v511 = vadd.f32 %v509, %v145
    %v512 = vmul.f32 %v511, 0.666
    %v513 = vtanh.pop %v512
    %v514 = vmul.f32 %v513, 1.7159
    %515 = vmatpush.msra.mxu0 %v83
    %516 = vmatpush.msra.mxu0 %v82
    %517 = vmatpush.msra.mxu0 %v81
    %518 = vmatpush.msra.mxu0 %v80
    %519 = vmatpush.msra.mxu0 %v79
    %520 = vmatpush.msra.mxu0 %v78
    %521 = vmatpush.msra.mxu0 %v77
    %522 = vmatpush.msra.mxu0 %v76
    %523 = vmatpush.msra.mxu0 %v75
    %524 = vmatpush.msra.mxu0 %v74
    %525 = vmatpush.msra.mxu0 %v73
    %526 = vmatpush.msra.mxu0 %v72
    %527 = vmatpush.msra.mxu0 %v71
    %528 = vmatpush.msra.mxu0 %v70
    %529 = vmatpush.msra.mxu0 %v69
    %530 = vmatpush.msra.mxu0 %v68
    %531 = vmatmul.f32.gmra.mxu0 %v514
    %v532 = vpop.f32.mrf.mxu0
    %v533 = vadd.f32 %v152, %v532
    %534 = vdwg.mxu0
    %v535 = vtanh.pop %v533
    %537 = vrot.lane.b32.xlu0 %v533, 96
    %v538 = vpop.permute.xlu0 %537
    %v540 = vadd.f32 %v533, %v538
    %v541 = vxor.u32 %v540, 2147483648
    %v542 = vmul.f32 %v541, 1.442695
    %v543 = vpow.pop %v542
    %v544 = vadd.f32 %v543, 1.0
    %v545 = vrcp.pop %v544
    %v546 = vmul.f32 %v544, %v545
    %v547 = vsub.f32 1.0, %v546
    %v548 = vmul.f32 %v545, %v547
    %v549 = vadd.f32 %v545, %v548
    %vm550 = vweird.f32 %v544
    %vm551 = vweird.f32 %v545
    %vm552 = vmor %vm550, %vm551
    %v553 = vsel %vm552, %v545, %v549
    %v554 = vand.u32 2147483647, %v544
    %vm555 = vcmp.eq.f32.partialorder %v554, 8.507059e+37
    %v556 = vand.u32 %v544, 2147483648
    %v557 = vor.u32 1.1754944e-38, %v556
    %v558 = vsel %vm555, %v557, %v553
    %v559 = vmul.f32 1.0, %v558
    %v560 = vsub.f32 1.0, %v559
    %562 = vrot.lane.b32.xlu0 %v560, 64
    %v563 = vpop.permute.xlu0 %562
    %v565 = vmul.f32 %v535, %v563
    %567 = vrot.lane.b32.xlu0 %v535, 32
    %v568 = vpop.permute.xlu0 %567
    %v570 = vmul.f32 %v559, %v568
    %572 = vrot.lane.b32.xlu0 %v570, 64
    %v573 = vpop.permute.xlu0 %572
    %v575 = vadd.f32 %v565, %v573
    %v577 = vrot.slane %v575, 1
    %579 = vst.msk [vmem:[#allocation8 + $0x3] sm:$0x1] %vm218, %v575
    %580 = vst.msk [vmem:[#allocation8 + $0xb] sm:$0x1] %vm218, %v577
    %v581 = vld [vmem:[%s0 + $0x4] sm:$0x1]
    %v582 = vld [vmem:[%s0 + $0xc] sm:$0x1]
    %v583 = vsel %vm88, %v575, 0
    %585 = vmatpush.msra.mxu0 0.0
    %586 = vmatpush.msra.mxu0 0.0
    %587 = vmatpush.msra.mxu0 0.0
    %588 = vmatpush.msra.mxu0 0.0
    %589 = vmatpush.msra.mxu0 0.0
    %590 = vmatpush.msra.mxu0 0.0
    %591 = vmatpush.msra.mxu0 0.0
    %592 = vmatpush.msra.mxu0 0.0
    %593 = vmatpush.msra.mxu0 0.0
    %594 = vmatpush.msra.mxu0 0.0
    %595 = vmatpush.msra.mxu0 0.0
    %596 = vmatpush.msra.mxu0 0.0
    %597 = vmatpush.msra.mxu0 %v66
    %598 = vmatpush.msra.mxu0 %v65
    %599 = vmatpush.msra.mxu0 %v64
    %600 = vmatpush.msra.mxu0 %v63
    %601 = vmatmul.f32.gmra.mxu0 %v583
    %v602 = vpop.f32.mrf.mxu0
    %v603 = vadd.f32 0.0, %v602
    %604 = vdwg.mxu0
    %v607 = vrot.slane %v582, 7
    %v608 = vsel %vm115, %v607, %v581
    %v609 = vsel %vm117, %v608, 0
    %611 = vmatpush.msra.mxu0 0.0
    %612 = vmatpush.msra.mxu0 0.0
    %613 = vmatpush.msra.mxu0 0.0
    %614 = vmatpush.msra.mxu0 0.0
    %615 = vmatpush.msra.mxu0 0.0
    %616 = vmatpush.msra.mxu0 0.0
    %617 = vmatpush.msra.mxu0 0.0
    %618 = vmatpush.msra.mxu0 0.0
    %619 = vmatpush.msra.mxu0 0.0
    %620 = vmatpush.msra.mxu0 0.0
    %621 = vmatpush.msra.mxu0 0.0
    %622 = vmatpush.msra.mxu0 0.0
    %623 = vmatpush.msra.mxu0 0.0
    %624 = vmatpush.msra.mxu0 0.0
    %625 = vmatpush.msra.mxu0 0.0
    %626 = vmatpush.msra.mxu0 %v122
    %627 = vmatmul.f32.gmra.mxu0 %v609
    %v628 = vpop.f32.mrf.mxu0
    %v629 = vadd.f32 %v603, %v628
    %630 = vdwg.mxu0
    %v631 = vadd.f32 %v629, %v145
    %v632 = vmul.f32 %v631, 0.666
    %v633 = vtanh.pop %v632
    %v634 = vmul.f32 %v633, 1.7159
    %635 = vmatpush.msra.mxu0 %v83
    %636 = vmatpush.msra.mxu0 %v82
    %637 = vmatpush.msra.mxu0 %v81
    %638 = vmatpush.msra.mxu0 %v80
    %639 = vmatpush.msra.mxu0 %v79
    %640 = vmatpush.msra.mxu0 %v78
    %641 = vmatpush.msra.mxu0 %v77
    %642 = vmatpush.msra.mxu0 %v76
    %643 = vmatpush.msra.mxu0 %v75
    %644 = vmatpush.msra.mxu0 %v74
    %645 = vmatpush.msra.mxu0 %v73
    %646 = vmatpush.msra.mxu0 %v72
    %647 = vmatpush.msra.mxu0 %v71
    %648 = vmatpush.msra.mxu0 %v70
    %649 = vmatpush.msra.mxu0 %v69
    %650 = vmatpush.msra.mxu0 %v68
    %651 = vmatmul.f32.gmra.mxu0 %v634
    %v652 = vpop.f32.mrf.mxu0
    %v653 = vadd.f32 %v152, %v652
    %654 = vdwg.mxu0
    %v655 = vtanh.pop %v653
    %657 = vrot.lane.b32.xlu0 %v653, 96
    %v658 = vpop.permute.xlu0 %657
    %v660 = vadd.f32 %v653, %v658
    %v661 = vxor.u32 %v660, 2147483648
    %v662 = vmul.f32 %v661, 1.442695
    %v663 = vpow.pop %v662
    %v664 = vadd.f32 %v663, 1.0
    %v665 = vrcp.pop %v664
    %v666 = vmul.f32 %v664, %v665
    %v667 = vsub.f32 1.0, %v666
    %v668 = vmul.f32 %v665, %v667
    %v669 = vadd.f32 %v665, %v668
    %vm670 = vweird.f32 %v664
    %vm671 = vweird.f32 %v665
    %vm672 = vmor %vm670, %vm671
    %v673 = vsel %vm672, %v665, %v669
    %v674 = vand.u32 2147483647, %v664
    %vm675 = vcmp.eq.f32.partialorder %v674, 8.507059e+37
    %v676 = vand.u32 %v664, 2147483648
    %v677 = vor.u32 1.1754944e-38, %v676
    %v678 = vsel %vm675, %v677, %v673
    %v679 = vmul.f32 1.0, %v678
    %v680 = vsub.f32 1.0, %v679
    %682 = vrot.lane.b32.xlu0 %v680, 64
    %v683 = vpop.permute.xlu0 %682
    %v685 = vmul.f32 %v655, %v683
    %687 = vrot.lane.b32.xlu0 %v655, 32
    %v688 = vpop.permute.xlu0 %687
    %v690 = vmul.f32 %v679, %v688
    %692 = vrot.lane.b32.xlu0 %v690, 64
    %v693 = vpop.permute.xlu0 %692
    %v695 = vadd.f32 %v685, %v693
    %v697 = vrot.slane %v695, 1
    %699 = vst.msk [vmem:[#allocation8 + $0x4] sm:$0x1] %vm218, %v695
    %700 = vst.msk [vmem:[#allocation8 + $0xc] sm:$0x1] %vm218, %v697
    %v701 = vld [vmem:[%s0 + $0x5] sm:$0x1]
    %v702 = vld [vmem:[%s0 + $0xd] sm:$0x1]
    %v703 = vsel %vm88, %v695, 0
    %705 = vmatpush.msra.mxu0 0.0
    %706 = vmatpush.msra.mxu0 0.0
    %707 = vmatpush.msra.mxu0 0.0
    %708 = vmatpush.msra.mxu0 0.0
    %709 = vmatpush.msra.mxu0 0.0
    %710 = vmatpush.msra.mxu0 0.0
    %711 = vmatpush.msra.mxu0 0.0
    %712 = vmatpush.msra.mxu0 0.0
    %713 = vmatpush.msra.mxu0 0.0
    %714 = vmatpush.msra.mxu0 0.0
    %715 = vmatpush.msra.mxu0 0.0
    %716 = vmatpush.msra.mxu0 0.0
    %717 = vmatpush.msra.mxu0 %v66
    %718 = vmatpush.msra.mxu0 %v65
    %719 = vmatpush.msra.mxu0 %v64
    %720 = vmatpush.msra.mxu0 %v63
    %721 = vmatmul.f32.gmra.mxu0 %v703
    %v722 = vpop.f32.mrf.mxu0
    %v723 = vadd.f32 0.0, %v722
    %724 = vdwg.mxu0
    %v727 = vrot.slane %v702, 7
    %v728 = vsel %vm115, %v727, %v701
    %v729 = vsel %vm117, %v728, 0
    %731 = vmatpush.msra.mxu0 0.0
    %732 = vmatpush.msra.mxu0 0.0
    %733 = vmatpush.msra.mxu0 0.0
    %734 = vmatpush.msra.mxu0 0.0
    %735 = vmatpush.msra.mxu0 0.0
    %736 = vmatpush.msra.mxu0 0.0
    %737 = vmatpush.msra.mxu0 0.0
    %738 = vmatpush.msra.mxu0 0.0
    %739 = vmatpush.msra.mxu0 0.0
    %740 = vmatpush.msra.mxu0 0.0
    %741 = vmatpush.msra.mxu0 0.0
    %742 = vmatpush.msra.mxu0 0.0
    %743 = vmatpush.msra.mxu0 0.0
    %744 = vmatpush.msra.mxu0 0.0
    %745 = vmatpush.msra.mxu0 0.0
    %746 = vmatpush.msra.mxu0 %v122
    %747 = vmatmul.f32.gmra.mxu0 %v729
    %v748 = vpop.f32.mrf.mxu0
    %v749 = vadd.f32 %v723, %v748
    %750 = vdwg.mxu0
    %v751 = vadd.f32 %v749, %v145
    %v752 = vmul.f32 %v751, 0.666
    %v753 = vtanh.pop %v752
    %v754 = vmul.f32 %v753, 1.7159
    %755 = vmatpush.msra.mxu0 %v83
    %756 = vmatpush.msra.mxu0 %v82
    %757 = vmatpush.msra.mxu0 %v81
    %758 = vmatpush.msra.mxu0 %v80
    %759 = vmatpush.msra.mxu0 %v79
    %760 = vmatpush.msra.mxu0 %v78
    %761 = vmatpush.msra.mxu0 %v77
    %762 = vmatpush.msra.mxu0 %v76
    %763 = vmatpush.msra.mxu0 %v75
    %764 = vmatpush.msra.mxu0 %v74
    %765 = vmatpush.msra.mxu0 %v73
    %766 = vmatpush.msra.mxu0 %v72
    %767 = vmatpush.msra.mxu0 %v71
    %768 = vmatpush.msra.mxu0 %v70
    %769 = vmatpush.msra.mxu0 %v69
    %770 = vmatpush.msra.mxu0 %v68
    %771 = vmatmul.f32.gmra.mxu0 %v754
    %v772 = vpop.f32.mrf.mxu0
    %v773 = vadd.f32 %v152, %v772
    %774 = vdwg.mxu0
    %v775 = vtanh.pop %v773
    %777 = vrot.lane.b32.xlu0 %v773, 96
    %v778 = vpop.permute.xlu0 %777
    %v780 = vadd.f32 %v773, %v778
    %v781 = vxor.u32 %v780, 2147483648
    %v782 = vmul.f32 %v781, 1.442695
    %v783 = vpow.pop %v782
    %v784 = vadd.f32 %v783, 1.0
    %v785 = vrcp.pop %v784
    %v786 = vmul.f32 %v784, %v785
    %v787 = vsub.f32 1.0, %v786
    %v788 = vmul.f32 %v785, %v787
    %v789 = vadd.f32 %v785, %v788
    %vm790 = vweird.f32 %v784
    %vm791 = vweird.f32 %v785
    %vm792 = vmor %vm790, %vm791
    %v793 = vsel %vm792, %v785, %v789
    %v794 = vand.u32 2147483647, %v784
    %vm795 = vcmp.eq.f32.partialorder %v794, 8.507059e+37
    %v796 = vand.u32 %v784, 2147483648
    %v797 = vor.u32 1.1754944e-38, %v796
    %v798 = vsel %vm795, %v797, %v793
    %v799 = vmul.f32 1.0, %v798
    %v800 = vsub.f32 1.0, %v799
    %802 = vrot.lane.b32.xlu0 %v800, 64
    %v803 = vpop.permute.xlu0 %802
    %v805 = vmul.f32 %v775, %v803
    %807 = vrot.lane.b32.xlu0 %v775, 32
    %v808 = vpop.permute.xlu0 %807
    %v810 = vmul.f32 %v799, %v808
    %812 = vrot.lane.b32.xlu0 %v810, 64
    %v813 = vpop.permute.xlu0 %812
    %v815 = vadd.f32 %v805, %v813
    %v817 = vrot.slane %v815, 1
    %819 = vst.msk [vmem:[#allocation8 + $0x5] sm:$0x1] %vm218, %v815
    %820 = vst.msk [vmem:[#allocation8 + $0xd] sm:$0x1] %vm218, %v817
    %v821 = vld [vmem:[%s0 + $0x6] sm:$0x1]
    %v822 = vld [vmem:[%s0 + $0xe] sm:$0x1]
    %v823 = vsel %vm88, %v815, 0
    %825 = vmatpush.msra.mxu0 0.0
    %826 = vmatpush.msra.mxu0 0.0
    %827 = vmatpush.msra.mxu0 0.0
    %828 = vmatpush.msra.mxu0 0.0
    %829 = vmatpush.msra.mxu0 0.0
    %830 = vmatpush.msra.mxu0 0.0
    %831 = vmatpush.msra.mxu0 0.0
    %832 = vmatpush.msra.mxu0 0.0
    %833 = vmatpush.msra.mxu0 0.0
    %834 = vmatpush.msra.mxu0 0.0
    %835 = vmatpush.msra.mxu0 0.0
    %836 = vmatpush.msra.mxu0 0.0
    %837 = vmatpush.msra.mxu0 %v66
    %838 = vmatpush.msra.mxu0 %v65
    %839 = vmatpush.msra.mxu0 %v64
    %840 = vmatpush.msra.mxu0 %v63
    %841 = vmatmul.f32.gmra.mxu0 %v823
    %v842 = vpop.f32.mrf.mxu0
    %v843 = vadd.f32 0.0, %v842
    %844 = vdwg.mxu0
    %v847 = vrot.slane %v822, 7
    %v848 = vsel %vm115, %v847, %v821
    %v849 = vsel %vm117, %v848, 0
    %851 = vmatpush.msra.mxu0 0.0
    %852 = vmatpush.msra.mxu0 0.0
    %853 = vmatpush.msra.mxu0 0.0
    %854 = vmatpush.msra.mxu0 0.0
    %855 = vmatpush.msra.mxu0 0.0
    %856 = vmatpush.msra.mxu0 0.0
    %857 = vmatpush.msra.mxu0 0.0
    %858 = vmatpush.msra.mxu0 0.0
    %859 = vmatpush.msra.mxu0 0.0
    %860 = vmatpush.msra.mxu0 0.0
    %861 = vmatpush.msra.mxu0 0.0
    %862 = vmatpush.msra.mxu0 0.0
    %863 = vmatpush.msra.mxu0 0.0
    %864 = vmatpush.msra.mxu0 0.0
    %865 = vmatpush.msra.mxu0 0.0
    %866 = vmatpush.msra.mxu0 %v122
    %867 = vmatmul.f32.gmra.mxu0 %v849
    %v868 = vpop.f32.mrf.mxu0
    %v869 = vadd.f32 %v843, %v868
    %870 = vdwg.mxu0
    %v871 = vadd.f32 %v869, %v145
    %v872 = vmul.f32 %v871, 0.666
    %v873 = vtanh.pop %v872
    %v874 = vmul.f32 %v873, 1.7159
    %875 = vmatpush.msra.mxu0 %v83
    %876 = vmatpush.msra.mxu0 %v82
    %877 = vmatpush.msra.mxu0 %v81
    %878 = vmatpush.msra.mxu0 %v80
    %879 = vmatpush.msra.mxu0 %v79
    %880 = vmatpush.msra.mxu0 %v78
    %881 = vmatpush.msra.mxu0 %v77
    %882 = vmatpush.msra.mxu0 %v76
    %883 = vmatpush.msra.mxu0 %v75
    %884 = vmatpush.msra.mxu0 %v74
    %885 = vmatpush.msra.mxu0 %v73
    %886 = vmatpush.msra.mxu0 %v72
    %887 = vmatpush.msra.mxu0 %v71
    %888 = vmatpush.msra.mxu0 %v70
    %889 = vmatpush.msra.mxu0 %v69
    %890 = vmatpush.msra.mxu0 %v68
    %891 = vmatmul.f32.gmra.mxu0 %v874
    %v892 = vpop.f32.mrf.mxu0
    %v893 = vadd.f32 %v152, %v892
    %894 = vdwg.mxu0
    %v895 = vtanh.pop %v893
    %897 = vrot.lane.b32.xlu0 %v893, 96
    %v898 = vpop.permute.xlu0 %897
    %v900 = vadd.f32 %v893, %v898
    %v901 = vxor.u32 %v900, 2147483648
    %v902 = vmul.f32 %v901, 1.442695
    %v903 = vpow.pop %v902
    %v904 = vadd.f32 %v903, 1.0
    %v905 = vrcp.pop %v904
    %v906 = vmul.f32 %v904, %v905
    %v907 = vsub.f32 1.0, %v906
    %v908 = vmul.f32 %v905, %v907
    %v909 = vadd.f32 %v905, %v908
    %vm910 = vweird.f32 %v904
    %vm911 = vweird.f32 %v905
    %vm912 = vmor %vm910, %vm911
    %v913 = vsel %vm912, %v905, %v909
    %v914 = vand.u32 2147483647, %v904
    %vm915 = vcmp.eq.f32.partialorder %v914, 8.507059e+37
    %v916 = vand.u32 %v904, 2147483648
    %v917 = vor.u32 1.1754944e-38, %v916
    %v918 = vsel %vm915, %v917, %v913
    %v919 = vmul.f32 1.0, %v918
    %v920 = vsub.f32 1.0, %v919
    %922 = vrot.lane.b32.xlu0 %v920, 64
    %v923 = vpop.permute.xlu0 %922
    %v925 = vmul.f32 %v895, %v923
    %927 = vrot.lane.b32.xlu0 %v895, 32
    %v928 = vpop.permute.xlu0 %927
    %v930 = vmul.f32 %v919, %v928
    %932 = vrot.lane.b32.xlu0 %v930, 64
    %v933 = vpop.permute.xlu0 %932
    %v935 = vadd.f32 %v925, %v933
    %v937 = vrot.slane %v935, 1
    %939 = vst.msk [vmem:[#allocation8 + $0x6] sm:$0x1] %vm218, %v935
    %940 = vst.msk [vmem:[#allocation8 + $0xe] sm:$0x1] %vm218, %v937
    %v941 = vld [vmem:[%s0 + $0x7] sm:$0x1]
    %v942 = vld [vmem:[%s0 + $0xf] sm:$0x1]
    %v943 = vsel %vm88, %v935, 0
    %945 = vmatpush.msra.mxu0 0.0
    %946 = vmatpush.msra.mxu0 0.0
    %947 = vmatpush.msra.mxu0 0.0
    %948 = vmatpush.msra.mxu0 0.0
    %949 = vmatpush.msra.mxu0 0.0
    %950 = vmatpush.msra.mxu0 0.0
    %951 = vmatpush.msra.mxu0 0.0
    %952 = vmatpush.msra.mxu0 0.0
    %953 = vmatpush.msra.mxu0 0.0
    %954 = vmatpush.msra.mxu0 0.0
    %955 = vmatpush.msra.mxu0 0.0
    %956 = vmatpush.msra.mxu0 0.0
    %957 = vmatpush.msra.mxu0 %v66
    %958 = vmatpush.msra.mxu0 %v65
    %959 = vmatpush.msra.mxu0 %v64
    %960 = vmatpush.msra.mxu0 %v63
    %961 = vmatmul.f32.gmra.mxu0 %v943
    %v962 = vpop.f32.mrf.mxu0
    %v963 = vadd.f32 0.0, %v962
    %964 = vdwg.mxu0
    %v967 = vrot.slane %v942, 7
    %v968 = vsel %vm115, %v967, %v941
    %v969 = vsel %vm117, %v968, 0
    %971 = vmatpush.msra.mxu0 0.0
    %972 = vmatpush.msra.mxu0 0.0
    %973 = vmatpush.msra.mxu0 0.0
    %974 = vmatpush.msra.mxu0 0.0
    %975 = vmatpush.msra.mxu0 0.0
    %976 = vmatpush.msra.mxu0 0.0
    %977 = vmatpush.msra.mxu0 0.0
    %978 = vmatpush.msra.mxu0 0.0
    %979 = vmatpush.msra.mxu0 0.0
    %980 = vmatpush.msra.mxu0 0.0
    %981 = vmatpush.msra.mxu0 0.0
    %982 = vmatpush.msra.mxu0 0.0
    %983 = vmatpush.msra.mxu0 0.0
    %984 = vmatpush.msra.mxu0 0.0
    %985 = vmatpush.msra.mxu0 0.0
    %986 = vmatpush.msra.mxu0 %v122
    %987 = vmatmul.f32.gmra.mxu0 %v969
    %v988 = vpop.f32.mrf.mxu0
    %v989 = vadd.f32 %v963, %v988
    %990 = vdwg.mxu0
    %v991 = vadd.f32 %v989, %v145
    %v992 = vmul.f32 %v991, 0.666
    %v993 = vtanh.pop %v992
    %v994 = vmul.f32 %v993, 1.7159
    %995 = vmatpush.msra.mxu0 %v83
    %996 = vmatpush.msra.mxu0 %v82
    %997 = vmatpush.msra.mxu0 %v81
    %998 = vmatpush.msra.mxu0 %v80
    %999 = vmatpush.msra.mxu0 %v79
    %1000 = vmatpush.msra.mxu0 %v78
    %1001 = vmatpush.msra.mxu0 %v77
    %1002 = vmatpush.msra.mxu0 %v76
    %1003 = vmatpush.msra.mxu0 %v75
    %1004 = vmatpush.msra.mxu0 %v74
    %1005 = vmatpush.msra.mxu0 %v73
    %1006 = vmatpush.msra.mxu0 %v72
    %1007 = vmatpush.msra.mxu0 %v71
    %1008 = vmatpush.msra.mxu0 %v70
    %1009 = vmatpush.msra.mxu0 %v69
    %1010 = vmatpush.msra.mxu0 %v68
    %1011 = vmatmul.f32.gmra.mxu0 %v994
    %v1012 = vpop.f32.mrf.mxu0
    %v1013 = vadd.f32 %v152, %v1012
    %1014 = vdwg.mxu0
    %v1015 = vtanh.pop %v1013
    %1017 = vrot.lane.b32.xlu0 %v1013, 96
    %v1018 = vpop.permute.xlu0 %1017
    %v1020 = vadd.f32 %v1013, %v1018
    %v1021 = vxor.u32 %v1020, 2147483648
    %v1022 = vmul.f32 %v1021, 1.442695
    %v1023 = vpow.pop %v1022
    %v1024 = vadd.f32 %v1023, 1.0
    %v1025 = vrcp.pop %v1024
    %v1026 = vmul.f32 %v1024, %v1025
    %v1027 = vsub.f32 1.0, %v1026
    %v1028 = vmul.f32 %v1025, %v1027
    %v1029 = vadd.f32 %v1025, %v1028
    %vm1030 = vweird.f32 %v1024
    %vm1031 = vweird.f32 %v1025
    %vm1032 = vmor %vm1030, %vm1031
    %v1033 = vsel %vm1032, %v1025, %v1029
    %v1034 = vand.u32 2147483647, %v1024
    %vm1035 = vcmp.eq.f32.partialorder %v1034, 8.507059e+37
    %v1036 = vand.u32 %v1024, 2147483648
    %v1037 = vor.u32 1.1754944e-38, %v1036
    %v1038 = vsel %vm1035, %v1037, %v1033
    %v1039 = vmul.f32 1.0, %v1038
    %v1040 = vsub.f32 1.0, %v1039
    %1042 = vrot.lane.b32.xlu0 %v1040, 64
    %v1043 = vpop.permute.xlu0 %1042
    %v1045 = vmul.f32 %v1015, %v1043
    %1047 = vrot.lane.b32.xlu0 %v1015, 32
    %v1048 = vpop.permute.xlu0 %1047
    %v1050 = vmul.f32 %v1039, %v1048
    %1052 = vrot.lane.b32.xlu0 %v1050, 64
    %v1053 = vpop.permute.xlu0 %1052
    %v1055 = vadd.f32 %v1045, %v1053
    %v1057 = vrot.slane %v1055, 1
    %1059 = vst.msk [vmem:[#allocation8 + $0x7] sm:$0x1] %vm218, %v1055
    %1060 = vst.msk [vmem:[#allocation8 + $0xf] sm:$0x1] %vm218, %v1057
    %vm1061 = vcmask 254976
    %1062 = vst.msk [vmem:[#allocation2] sm:$0x3] %vm1061, %v1055
    // Predicated region
    $region38: #{tpu_custom_call.1} parent=1 // pred_check
      _
    $region39: #{tpu_custom_call.1} parent=1 // pred_check_branch
      %1064 = sbr.rel (0) target = $region41
    $region40: #{tpu_custom_call.1} parent=1 // pred_region
      %1066 = vsyncadd [#allocation5], 0
      %s1067 = sshll.u32 [#allocation8], 4
      %s1068 = int_to_ptr.vmem [resolvable:$true] %s1067
      %s1069 = sshll.u32 %s6, 4
      %s1070 = int_to_ptr.hbm [resolvable:$true] %s1069
      %1075 = dma.vmem_to_hbm [thread:$0]  %s1068, 256, %s1070, [#allocation5], 128, 128, 8
    $region41: #{tpu_custom_call.1} parent=1 // pred_fallthru
      _
    // Predicated region
    $region42: #{tpu_custom_call.1} parent=1 // pred_check
      _
    $region43: #{tpu_custom_call.1} parent=1 // pred_check_branch
      %1077 = sbr.rel (0) target = $region45
    $region44: #{tpu_custom_call.1} parent=1 // pred_region
      %1079 = dma.done [#allocation5], 256
    $region45: #{tpu_custom_call.1} parent=1 // pred_fallthru
      _
    %1080 = vsyncpa [#allocation4], 1
    %1081 = vsyncpa [#allocation7], 1
    %1082 = vsyncpa [#allocation5], 1

</llo_original>
